<compile_context>
chip_gen: v7x
topology: tpu7x:2x2x1
jax: 0.10.0
libtpu: 0.0.40
codegen_flags: <defaults>
</compile_context>

<pallas_src>
import jax
import jax.numpy as jnp
import numpy as np
from jax.experimental import pallas as pl
from jax.experimental.pallas import tpu as pltpu


GATE_LANES = 128   # per-gate lane-aligned block width (gates at lane offsets 0/128/256)
SUBLANES = 8       # batch rows padded to a full sublane tile per timestep


def gru_kernel(tok_ref, egi_ref, h0_ref, whh_ref, bhn_ref, wo_ref, bo_ref, out_ref):
    """Single invocation: fused gather + GRU recurrence + h2o linear + softmax.

    tok_ref : (S*8, 1) int32  token id feeding row t*8+b (padded rows = -1)
    egi_ref : (Vp, 3*128)     precomputed  emb @ W_ih  (+ folded r/z/n input biases),
                              gate blocks [r | z | n] at lane offsets 0/128/256
    h0_ref  : (8, 128)        initial hidden state, zero-padded to (8 sublanes, 128 lanes)
    whh_ref : (128, 3*128)    hidden->hidden weights, same gate layout, zero-padded
    bhn_ref : (1, 128)        b_hn only (kept inside the loop: multiplied by r)
    wo_ref  : (128, C)        h2o weight (rows >= H are zero)
    bo_ref  : (1, C)
    out_ref : (B, C)          softmax probabilities
    """
    SP = tok_ref.shape[0]          # S * 8
    Vp = egi_ref.shape[0]
    P, L = h0_ref.shape            # 8, 128

    S = SP // P

    # (1) Fused embedding gather + hoisted input projection: build a one-hot
    #     selector from iota == token id and run ONE MXU matmul against the
    #     precomputed projection table. Padded batch rows (token id -1) select
    #     nothing -> all-zero gi rows (harmless: those h rows are never read).
    tok = tok_ref[...]                                                  # (S*8, 1)
    onehot = (jax.lax.broadcasted_iota(jnp.int32, (SP, Vp), 1) == tok).astype(jnp.float32)
    gi_all = jnp.dot(onehot, egi_ref[...],
                     preferred_element_type=jnp.float32)                # (S*8, 3*128)

    # Hoist the b_hn sublane-broadcast out of the loop (JAX does not CSE it).
    bhn = jnp.broadcast_to(bhn_ref[...], (P, L))                        # (8, 128)

    # (2) GRU recurrence, fully unrolled with STATIC vreg-aligned slices.
    #     PyTorch gate order (r, z, n):
    #       r = sigmoid(W_ir x + b_ir + W_hr h + b_hr)   [b_ir+b_hr folded into gi]
    #       z = sigmoid(W_iz x + b_iz + W_hz h + b_hz)   [b_iz+b_hz folded into gi]
    #       n = tanh  (W_in x + b_in + r * (W_hn h + b_hn))
    #       h = n + z * (h - n)
    h = h0_ref[...]                                                     # (8, 128)
    for t in range(S):
        gi = gi_all[t * P:(t + 1) * P, :]                               # (8, 384), static slice
        gh = jnp.dot(h, whh_ref[...],
                     preferred_element_type=jnp.float32)                # (8, 384), one MXU issue
        r = jax.nn.sigmoid(gi[:, 0:L] + gh[:, 0:L])
        z = jax.nn.sigmoid(gi[:, L:2 * L] + gh[:, L:2 * L])
        n = jnp.tanh(gi[:, 2 * L:3 * L] + (gh[:, 2 * L:3 * L] + bhn) * r)
        h = n + z * (h - n)

    # (3) h2o linear + softmax over classes (dim=1). Padded lanes/rows of h are
    #     zero and wo rows >= H are zero, so the padded state never leaks in.
    logits = jnp.dot(h, wo_ref[...], preferred_element_type=jnp.float32) + bo_ref[...]
    m = jnp.max(logits, axis=1, keepdims=True)
    e = jnp.exp(logits - m)
    probs = e / jnp.sum(e, axis=1, keepdims=True)
    out_ref[...] = probs[:out_ref.shape[0], :]


def prepare_packed_params(params):
    """One-time packing of weights into TPU-friendly layouts (hoisted out of forward).

    Gate order is (r, z, n); each gate occupies a 128-lane-aligned column block.
    """
    emb = params["emb"].astype(jnp.float32)          # (V, H)
    V, H = emb.shape
    C = params["wo"].shape[1]
    L = GATE_LANES
    assert H <= L, "hidden sizes > 128 need per-gate lane tiling"  # TODO(synk)
    Vp = ((V + L - 1) // L) * L

    w_ih, w_hh = params["w_ih"], params["w_hh"]      # (3, H, H), x @ W layout
    b_ih, b_hh = params["b_ih"], params["b_hh"]      # (3, 1, H)

    w_ih_pad = jnp.zeros((H, 3 * L), jnp.float32)
    w_hh_pad = jnp.zeros((L, 3 * L), jnp.float32)
    for g in range(3):
        w_ih_pad = w_ih_pad.at[:, g * L:g * L + H].set(w_ih[g])
        w_hh_pad = w_hh_pad.at[:H, g * L:g * L + H].set(w_hh[g])

    # Fold b_ir+b_hr and b_iz+b_hz into the hoisted projection; b_in stays with the
    # input projection; b_hn must remain inside the recurrence (multiplied by r).
    b_comb = jnp.zeros((1, 3 * L), jnp.float32)
    b_comb = b_comb.at[:, 0 * L:0 * L + H].set(b_ih[0] + b_hh[0])
    b_comb = b_comb.at[:, 1 * L:1 * L + H].set(b_ih[1] + b_hh[1])
    b_comb = b_comb.at[:, 2 * L:2 * L + H].set(b_ih[2])
    b_hn_pad = jnp.zeros((1, L), jnp.float32).at[:, :H].set(b_hh[2][0])

    # Fused embedding->input-projection table: row v = emb[v] @ W_ih + folded bias.
    emb_pad = jnp.zeros((Vp, H), jnp.float32).at[:V].set(emb)
    e_gi = jnp.dot(emb_pad, w_ih_pad, preferred_element_type=jnp.float32) + b_comb

    wo_pad = jnp.zeros((L, C), jnp.float32).at[:H].set(params["wo"])
    bo = params["bo"].reshape(1, C).astype(jnp.float32)

    return {"e_gi": e_gi, "w_hh": w_hh_pad, "b_hn": b_hn_pad, "wo": wo_pad, "bo": bo}


@jax.jit
def rnn_model_forward(tokens, h0, packed):
    """tokens: (B, S) int32, h0: (1, B, H) f32. Returns softmax probs (B, C)."""
    B, S = tokens.shape
    H = h0.shape[-1]
    L = packed["w_hh"].shape[0]          # padded hidden width (= GATE_LANES)
    Vp = packed["e_gi"].shape[0]
    C = packed["wo"].shape[1]
    P = SUBLANES

    # Token ids laid out exactly as torch's `.view(-1, B, H)` reinterprets the
    # embedded buffer: step-t rows come from tokens.reshape(S, B)[t] (a row-major
    # reshape, NOT a transpose — faithful to the quirky PyTorch model and to the
    # pure-JAX reference below). Pad batch rows to 8 sublanes with token id -1.
    tok_sb = tokens.reshape(S, B).astype(jnp.int32)
    tok_pad = jnp.full((S, P), -1, jnp.int32).at[:, :B].set(tok_sb)
    tok_col = tok_pad.reshape(S * P, 1)

    h0_pad = jnp.zeros((P, L), jnp.float32).at[:B, :H].set(h0.reshape(B, H))

    out = pl.pallas_call(
        gru_kernel,
        out_shape=jax.ShapeDtypeStruct((B, C), jnp.float32),
        grid_spec=pltpu.PrefetchScalarGridSpec(
            num_scalar_prefetch=0,
            grid=(1,),                                            # single invocation
            in_specs=[
                pl.BlockSpec((S * P, 1), lambda i: (0, 0)),       # token ids (padded)
                pl.BlockSpec((Vp, 3 * L), lambda i: (0, 0)),      # fused emb @ W_ih (+bias)
                pl.BlockSpec((P, L), lambda i: (0, 0)),           # h0 (padded)
                pl.BlockSpec((L, 3 * L), lambda i: (0, 0)),       # W_hh [r|z|n], lane-aligned
                pl.BlockSpec((1, L), lambda i: (0, 0)),           # b_hn
                pl.BlockSpec((L, C), lambda i: (0, 0)),           # h2o weight (padded rows)
                pl.BlockSpec((1, C), lambda i: (0, 0)),           # h2o bias
            ],
            out_specs=pl.BlockSpec((B, C), lambda i: (0, 0)),
        ),
        compiler_params=pltpu.CompilerParams(dimension_semantics=("arbitrary",)),
    )(tok_col, packed["e_gi"], h0_pad, packed["w_hh"], packed["b_hn"],
      packed["wo"], packed["bo"])
    return out


def reference_forward(tokens, h0, params):
    """Pure-JAX reference of the same forward pass (for correctness check)."""
    B, S = tokens.shape
    H = params["emb"].shape[1]
    emb = params["emb"][tokens]
    x_seq = emb.reshape(-1, B, H)
    h = h0.reshape(B, H)

    def step(h, x_t):
        gi = [x_t @ params["w_ih"][g] + params["b_ih"][g][0] for g in range(3)]
        gh = [h @ params["w_hh"][g] + params["b_hh"][g][0] for g in range(3)]
        r = jax.nn.sigmoid(gi[0] + gh[0])
        z = jax.nn.sigmoid(gi[1] + gh[1])
        n = jnp.tanh(gi[2] + r * gh[2])
        h_new = (1.0 - z) * n + z * h
        return h_new, None

    h_T, _ = jax.lax.scan(step, h, x_seq)
    logits = h_T @ params["wo"] + params["bo"]
    return jax.nn.softmax(logits, axis=1)


def init_params(key, vocab_size, H, C):
    ks = jax.random.split(key, 8)
    bound = 1.0 / np.sqrt(H)
    u = lambda k, shape: jax.random.uniform(k, shape, jnp.float32, -bound, bound)
    return {
        "emb":  jax.random.normal(ks[0], (vocab_size, H), jnp.float32),
        "w_ih": u(ks[1], (3, H, H)),   # gate order r, z, n; each (H_in, H) (x @ W)
        "w_hh": u(ks[2], (3, H, H)),
        "b_ih": u(ks[3], (3, 1, H)),
        "b_hh": u(ks[4], (3, 1, H)),
        "wo":   u(ks[5], (H, C)),
        "bo":   u(ks[6], (1, C)),
    }


if __name__ == "__main__":
    B, S, H, C, V = 2, 8, 32, 2, 50

    key = jax.random.PRNGKey(0)
    kp, kt = jax.random.split(key)
    params = init_params(kp, V, H, C)
    packed = prepare_packed_params(params)       # one-time weight packing (not per call)
    tokens = jax.random.randint(kt, (B, S), 0, V, dtype=jnp.int32)
    h0 = jnp.zeros((1, B, H), jnp.float32)       # initHidden(batch_size=B, bi=False)

    probs = jax.block_until_ready(rnn_model_forward(tokens, h0, packed))
    ref = jax.block_until_ready(reference_forward(tokens, h0, params))

    assert probs.shape == (B, C)
    # Slightly looser than f32 ulp: bias folding / one-hot-matmul gather reassociate
    # a few f32 sums relative to the reference, but probabilities stay within ~1e-5.
    np.testing.assert_allclose(np.asarray(probs), np.asarray(ref), rtol=1e-4, atol=1e-5)
    print("KERNEL_OK")
</pallas_src>

<mosaic_0001>
module attributes {stable_mosaic.version = 11 : i64} {
  func.func @gru_kernel(%arg0: i32, %arg1: memref<64x1xi32, #tpu.memory_space<vmem>>, %arg2: memref<128x384xf32, #tpu.memory_space<vmem>>, %arg3: memref<8x128xf32, #tpu.memory_space<vmem>>, %arg4: memref<128x384xf32, #tpu.memory_space<vmem>>, %arg5: memref<1x128xf32, #tpu.memory_space<vmem>>, %arg6: memref<128x2xf32, #tpu.memory_space<vmem>>, %arg7: memref<1x2xf32, #tpu.memory_space<vmem>>, %arg8: memref<2x2xf32, #tpu.memory_space<vmem>>) attributes {dimension_semantics = [#tpu.dimension_semantics<arbitrary>], iteration_bounds = array<i64: 1>, scalar_prefetch = 0 : i64, scratch_operands = 0 : i64, tpu.core_type = #tpu.core_type<tc>, window_params = [{pipeline_mode = #tpu.pipeline_mode<synchronous>, transform_indices = @transform_0, window_bounds = array<i64: 64, 1>}, {pipeline_mode = #tpu.pipeline_mode<synchronous>, transform_indices = @transform_1, window_bounds = array<i64: 128, 384>}, {pipeline_mode = #tpu.pipeline_mode<synchronous>, transform_indices = @transform_2, window_bounds = array<i64: 8, 128>}, {pipeline_mode = #tpu.pipeline_mode<synchronous>, transform_indices = @transform_3, window_bounds = array<i64: 128, 384>}, {pipeline_mode = #tpu.pipeline_mode<synchronous>, transform_indices = @transform_4, window_bounds = array<i64: 1, 128>}, {pipeline_mode = #tpu.pipeline_mode<synchronous>, transform_indices = @transform_5, window_bounds = array<i64: 128, 2>}, {pipeline_mode = #tpu.pipeline_mode<synchronous>, transform_indices = @transform_6, window_bounds = array<i64: 1, 2>}, {pipeline_mode = #tpu.pipeline_mode<synchronous>, transform_indices = @transform_7, window_bounds = array<i64: 2, 2>}]} {
    %c0 = arith.constant 0 : index
    %c0_0 = arith.constant 0 : index
    %0 = vector.load %arg1[%c0, %c0_0] : memref<64x1xi32, #tpu.memory_space<vmem>>, vector<64x1xi32>
    %1 = tpu.iota {dimensions = array<i32: 1>} : vector<64x128xi32>
    %2 = vector.broadcast %0 : vector<64x1xi32> to vector<64x128xi32>
    %3 = arith.cmpi eq, %1, %2 : vector<64x128xi32>
    %4 = arith.extui %3 : vector<64x128xi1> to vector<64x128xi32>
    %5 = arith.sitofp %4 : vector<64x128xi32> to vector<64x128xf32>
    %c0_1 = arith.constant 0 : index
    %c0_2 = arith.constant 0 : index
    %6 = vector.load %arg2[%c0_1, %c0_2] : memref<128x384xf32, #tpu.memory_space<vmem>>, vector<128x384xf32>
    %cst = arith.constant dense<0.000000e+00> : vector<64x384xf32>
    %7 = tpu.matmul %5, %6, %cst {dimension_numbers = #tpu.dot_dimension_numbers<[1], [0], [0], [1], [0, 0, 1, 1], [], []>} : vector<64x128xf32>, vector<128x384xf32>, vector<64x384xf32> -> vector<64x384xf32>
    %c0_3 = arith.constant 0 : index
    %c0_4 = arith.constant 0 : index
    %8 = vector.load %arg5[%c0_3, %c0_4] : memref<1x128xf32, #tpu.memory_space<vmem>>, vector<1x128xf32>
    %9 = vector.shape_cast %8 : vector<1x128xf32> to vector<1x128xf32>
    %10 = vector.broadcast %9 : vector<1x128xf32> to vector<8x128xf32>
    %c0_5 = arith.constant 0 : index
    %c0_6 = arith.constant 0 : index
    %11 = vector.load %arg3[%c0_5, %c0_6] : memref<8x128xf32, #tpu.memory_space<vmem>>, vector<8x128xf32>
    %12 = vector.extract_strided_slice %7 {offsets = [0, 0], sizes = [8, 384], strides = [1, 1]} : vector<64x384xf32> to vector<8x384xf32>
    %c0_7 = arith.constant 0 : index
    %c0_8 = arith.constant 0 : index
    %13 = vector.load %arg4[%c0_7, %c0_8] : memref<128x384xf32, #tpu.memory_space<vmem>>, vector<128x384xf32>
    %cst_9 = arith.constant dense<0.000000e+00> : vector<8x384xf32>
    %14 = tpu.matmul %11, %13, %cst_9 {dimension_numbers = #tpu.dot_dimension_numbers<[1], [0], [0], [1], [0, 0, 1, 1], [], []>} : vector<8x128xf32>, vector<128x384xf32>, vector<8x384xf32> -> vector<8x384xf32>
    %15 = vector.extract_strided_slice %12 {offsets = [0, 0], sizes = [8, 128], strides = [1, 1]} : vector<8x384xf32> to vector<8x128xf32>
    %16 = vector.extract_strided_slice %14 {offsets = [0, 0], sizes = [8, 128], strides = [1, 1]} : vector<8x384xf32> to vector<8x128xf32>
    %17 = arith.addf %15, %16 : vector<8x128xf32>
    %18 = arith.negf %17 : vector<8x128xf32>
    %19 = math.exp %18 : vector<8x128xf32>
    %cst_10 = arith.constant 1.000000e+00 : f32
    %20 = vector.broadcast %cst_10 : f32 to vector<8x128xf32>
    %21 = arith.addf %20, %19 : vector<8x128xf32>
    %22 = arith.divf %20, %21 : vector<8x128xf32>
    %23 = vector.extract_strided_slice %12 {offsets = [0, 128], sizes = [8, 128], strides = [1, 1]} : vector<8x384xf32> to vector<8x128xf32>
    %24 = vector.extract_strided_slice %14 {offsets = [0, 128], sizes = [8, 128], strides = [1, 1]} : vector<8x384xf32> to vector<8x128xf32>
    %25 = arith.addf %23, %24 : vector<8x128xf32>
    %26 = arith.negf %25 : vector<8x128xf32>
    %27 = math.exp %26 : vector<8x128xf32>
    %cst_11 = arith.constant 1.000000e+00 : f32
    %28 = vector.broadcast %cst_11 : f32 to vector<8x128xf32>
    %29 = arith.addf %28, %27 : vector<8x128xf32>
    %30 = arith.divf %28, %29 : vector<8x128xf32>
    %31 = vector.extract_strided_slice %12 {offsets = [0, 256], sizes = [8, 128], strides = [1, 1]} : vector<8x384xf32> to vector<8x128xf32>
    %32 = vector.extract_strided_slice %14 {offsets = [0, 256], sizes = [8, 128], strides = [1, 1]} : vector<8x384xf32> to vector<8x128xf32>
    %33 = arith.addf %32, %10 : vector<8x128xf32>
    %34 = arith.mulf %33, %22 : vector<8x128xf32>
    %35 = arith.addf %31, %34 : vector<8x128xf32>
    %36 = math.tanh %35 : vector<8x128xf32>
    %37 = arith.subf %11, %36 : vector<8x128xf32>
    %38 = arith.mulf %30, %37 : vector<8x128xf32>
    %39 = arith.addf %36, %38 : vector<8x128xf32>
    %40 = vector.extract_strided_slice %7 {offsets = [8, 0], sizes = [8, 384], strides = [1, 1]} : vector<64x384xf32> to vector<8x384xf32>
    %c0_12 = arith.constant 0 : index
    %c0_13 = arith.constant 0 : index
    %41 = vector.load %arg4[%c0_12, %c0_13] : memref<128x384xf32, #tpu.memory_space<vmem>>, vector<128x384xf32>
    %cst_14 = arith.constant dense<0.000000e+00> : vector<8x384xf32>
    %42 = tpu.matmul %39, %41, %cst_14 {dimension_numbers = #tpu.dot_dimension_numbers<[1], [0], [0], [1], [0, 0, 1, 1], [], []>} : vector<8x128xf32>, vector<128x384xf32>, vector<8x384xf32> -> vector<8x384xf32>
    %43 = vector.extract_strided_slice %40 {offsets = [0, 0], sizes = [8, 128], strides = [1, 1]} : vector<8x384xf32> to vector<8x128xf32>
    %44 = vector.extract_strided_slice %42 {offsets = [0, 0], sizes = [8, 128], strides = [1, 1]} : vector<8x384xf32> to vector<8x128xf32>
    %45 = arith.addf %43, %44 : vector<8x128xf32>
    %46 = arith.negf %45 : vector<8x128xf32>
    %47 = math.exp %46 : vector<8x128xf32>
    %cst_15 = arith.constant 1.000000e+00 : f32
    %48 = vector.broadcast %cst_15 : f32 to vector<8x128xf32>
    %49 = arith.addf %48, %47 : vector<8x128xf32>
    %50 = arith.divf %48, %49 : vector<8x128xf32>
    %51 = vector.extract_strided_slice %40 {offsets = [0, 128], sizes = [8, 128], strides = [1, 1]} : vector<8x384xf32> to vector<8x128xf32>
    %52 = vector.extract_strided_slice %42 {offsets = [0, 128], sizes = [8, 128], strides = [1, 1]} : vector<8x384xf32> to vector<8x128xf32>
    %53 = arith.addf %51, %52 : vector<8x128xf32>
    %54 = arith.negf %53 : vector<8x128xf32>
    %55 = math.exp %54 : vector<8x128xf32>
    %cst_16 = arith.constant 1.000000e+00 : f32
    %56 = vector.broadcast %cst_16 : f32 to vector<8x128xf32>
    %57 = arith.addf %56, %55 : vector<8x128xf32>
    %58 = arith.divf %56, %57 : vector<8x128xf32>
    %59 = vector.extract_strided_slice %40 {offsets = [0, 256], sizes = [8, 128], strides = [1, 1]} : vector<8x384xf32> to vector<8x128xf32>
    %60 = vector.extract_strided_slice %42 {offsets = [0, 256], sizes = [8, 128], strides = [1, 1]} : vector<8x384xf32> to vector<8x128xf32>
    %61 = arith.addf %60, %10 : vector<8x128xf32>
    %62 = arith.mulf %61, %50 : vector<8x128xf32>
    %63 = arith.addf %59, %62 : vector<8x128xf32>
    %64 = math.tanh %63 : vector<8x128xf32>
    %65 = arith.subf %39, %64 : vector<8x128xf32>
    %66 = arith.mulf %58, %65 : vector<8x128xf32>
    %67 = arith.addf %64, %66 : vector<8x128xf32>
    %68 = vector.extract_strided_slice %7 {offsets = [16, 0], sizes = [8, 384], strides = [1, 1]} : vector<64x384xf32> to vector<8x384xf32>
    %c0_17 = arith.constant 0 : index
    %c0_18 = arith.constant 0 : index
    %69 = vector.load %arg4[%c0_17, %c0_18] : memref<128x384xf32, #tpu.memory_space<vmem>>, vector<128x384xf32>
    %cst_19 = arith.constant dense<0.000000e+00> : vector<8x384xf32>
    %70 = tpu.matmul %67, %69, %cst_19 {dimension_numbers = #tpu.dot_dimension_numbers<[1], [0], [0], [1], [0, 0, 1, 1], [], []>} : vector<8x128xf32>, vector<128x384xf32>, vector<8x384xf32> -> vector<8x384xf32>
    %71 = vector.extract_strided_slice %68 {offsets = [0, 0], sizes = [8, 128], strides = [1, 1]} : vector<8x384xf32> to vector<8x128xf32>
    %72 = vector.extract_strided_slice %70 {offsets = [0, 0], sizes = [8, 128], strides = [1, 1]} : vector<8x384xf32> to vector<8x128xf32>
    %73 = arith.addf %71, %72 : vector<8x128xf32>
    %74 = arith.negf %73 : vector<8x128xf32>
    %75 = math.exp %74 : vector<8x128xf32>
    %cst_20 = arith.constant 1.000000e+00 : f32
    %76 = vector.broadcast %cst_20 : f32 to vector<8x128xf32>
    %77 = arith.addf %76, %75 : vector<8x128xf32>
    %78 = arith.divf %76, %77 : vector<8x128xf32>
    %79 = vector.extract_strided_slice %68 {offsets = [0, 128], sizes = [8, 128], strides = [1, 1]} : vector<8x384xf32> to vector<8x128xf32>
    %80 = vector.extract_strided_slice %70 {offsets = [0, 128], sizes = [8, 128], strides = [1, 1]} : vector<8x384xf32> to vector<8x128xf32>
    %81 = arith.addf %79, %80 : vector<8x128xf32>
    %82 = arith.negf %81 : vector<8x128xf32>
    %83 = math.exp %82 : vector<8x128xf32>
    %cst_21 = arith.constant 1.000000e+00 : f32
    %84 = vector.broadcast %cst_21 : f32 to vector<8x128xf32>
    %85 = arith.addf %84, %83 : vector<8x128xf32>
    %86 = arith.divf %84, %85 : vector<8x128xf32>
    %87 = vector.extract_strided_slice %68 {offsets = [0, 256], sizes = [8, 128], strides = [1, 1]} : vector<8x384xf32> to vector<8x128xf32>
    %88 = vector.extract_strided_slice %70 {offsets = [0, 256], sizes = [8, 128], strides = [1, 1]} : vector<8x384xf32> to vector<8x128xf32>
    %89 = arith.addf %88, %10 : vector<8x128xf32>
    %90 = arith.mulf %89, %78 : vector<8x128xf32>
    %91 = arith.addf %87, %90 : vector<8x128xf32>
    %92 = math.tanh %91 : vector<8x128xf32>
    %93 = arith.subf %67, %92 : vector<8x128xf32>
    %94 = arith.mulf %86, %93 : vector<8x128xf32>
    %95 = arith.addf %92, %94 : vector<8x128xf32>
    %96 = vector.extract_strided_slice %7 {offsets = [24, 0], sizes = [8, 384], strides = [1, 1]} : vector<64x384xf32> to vector<8x384xf32>
    %c0_22 = arith.constant 0 : index
    %c0_23 = arith.constant 0 : index
    %97 = vector.load %arg4[%c0_22, %c0_23] : memref<128x384xf32, #tpu.memory_space<vmem>>, vector<128x384xf32>
    %cst_24 = arith.constant dense<0.000000e+00> : vector<8x384xf32>
    %98 = tpu.matmul %95, %97, %cst_24 {dimension_numbers = #tpu.dot_dimension_numbers<[1], [0], [0], [1], [0, 0, 1, 1], [], []>} : vector<8x128xf32>, vector<128x384xf32>, vector<8x384xf32> -> vector<8x384xf32>
    %99 = vector.extract_strided_slice %96 {offsets = [0, 0], sizes = [8, 128], strides = [1, 1]} : vector<8x384xf32> to vector<8x128xf32>
    %100 = vector.extract_strided_slice %98 {offsets = [0, 0], sizes = [8, 128], strides = [1, 1]} : vector<8x384xf32> to vector<8x128xf32>
    %101 = arith.addf %99, %100 : vector<8x128xf32>
    %102 = arith.negf %101 : vector<8x128xf32>
    %103 = math.exp %102 : vector<8x128xf32>
    %cst_25 = arith.constant 1.000000e+00 : f32
    %104 = vector.broadcast %cst_25 : f32 to vector<8x128xf32>
    %105 = arith.addf %104, %103 : vector<8x128xf32>
    %106 = arith.divf %104, %105 : vector<8x128xf32>
    %107 = vector.extract_strided_slice %96 {offsets = [0, 128], sizes = [8, 128], strides = [1, 1]} : vector<8x384xf32> to vector<8x128xf32>
    %108 = vector.extract_strided_slice %98 {offsets = [0, 128], sizes = [8, 128], strides = [1, 1]} : vector<8x384xf32> to vector<8x128xf32>
    %109 = arith.addf %107, %108 : vector<8x128xf32>
    %110 = arith.negf %109 : vector<8x128xf32>
    %111 = math.exp %110 : vector<8x128xf32>
    %cst_26 = arith.constant 1.000000e+00 : f32
    %112 = vector.broadcast %cst_26 : f32 to vector<8x128xf32>
    %113 = arith.addf %112, %111 : vector<8x128xf32>
    %114 = arith.divf %112, %113 : vector<8x128xf32>
    %115 = vector.extract_strided_slice %96 {offsets = [0, 256], sizes = [8, 128], strides = [1, 1]} : vector<8x384xf32> to vector<8x128xf32>
    %116 = vector.extract_strided_slice %98 {offsets = [0, 256], sizes = [8, 128], strides = [1, 1]} : vector<8x384xf32> to vector<8x128xf32>
    %117 = arith.addf %116, %10 : vector<8x128xf32>
    %118 = arith.mulf %117, %106 : vector<8x128xf32>
    %119 = arith.addf %115, %118 : vector<8x128xf32>
    %120 = math.tanh %119 : vector<8x128xf32>
    %121 = arith.subf %95, %120 : vector<8x128xf32>
    %122 = arith.mulf %114, %121 : vector<8x128xf32>
    %123 = arith.addf %120, %122 : vector<8x128xf32>
    %124 = vector.extract_strided_slice %7 {offsets = [32, 0], sizes = [8, 384], strides = [1, 1]} : vector<64x384xf32> to vector<8x384xf32>
    %c0_27 = arith.constant 0 : index
    %c0_28 = arith.constant 0 : index
    %125 = vector.load %arg4[%c0_27, %c0_28] : memref<128x384xf32, #tpu.memory_space<vmem>>, vector<128x384xf32>
    %cst_29 = arith.constant dense<0.000000e+00> : vector<8x384xf32>
    %126 = tpu.matmul %123, %125, %cst_29 {dimension_numbers = #tpu.dot_dimension_numbers<[1], [0], [0], [1], [0, 0, 1, 1], [], []>} : vector<8x128xf32>, vector<128x384xf32>, vector<8x384xf32> -> vector<8x384xf32>
    %127 = vector.extract_strided_slice %124 {offsets = [0, 0], sizes = [8, 128], strides = [1, 1]} : vector<8x384xf32> to vector<8x128xf32>
    %128 = vector.extract_strided_slice %126 {offsets = [0, 0], sizes = [8, 128], strides = [1, 1]} : vector<8x384xf32> to vector<8x128xf32>
    %129 = arith.addf %127, %128 : vector<8x128xf32>
    %130 = arith.negf %129 : vector<8x128xf32>
    %131 = math.exp %130 : vector<8x128xf32>
    %cst_30 = arith.constant 1.000000e+00 : f32
    %132 = vector.broadcast %cst_30 : f32 to vector<8x128xf32>
    %133 = arith.addf %132, %131 : vector<8x128xf32>
    %134 = arith.divf %132, %133 : vector<8x128xf32>
    %135 = vector.extract_strided_slice %124 {offsets = [0, 128], sizes = [8, 128], strides = [1, 1]} : vector<8x384xf32> to vector<8x128xf32>
    %136 = vector.extract_strided_slice %126 {offsets = [0, 128], sizes = [8, 128], strides = [1, 1]} : vector<8x384xf32> to vector<8x128xf32>
    %137 = arith.addf %135, %136 : vector<8x128xf32>
    %138 = arith.negf %137 : vector<8x128xf32>
    %139 = math.exp %138 : vector<8x128xf32>
    %cst_31 = arith.constant 1.000000e+00 : f32
    %140 = vector.broadcast %cst_31 : f32 to vector<8x128xf32>
    %141 = arith.addf %140, %139 : vector<8x128xf32>
    %142 = arith.divf %140, %141 : vector<8x128xf32>
    %143 = vector.extract_strided_slice %124 {offsets = [0, 256], sizes = [8, 128], strides = [1, 1]} : vector<8x384xf32> to vector<8x128xf32>
    %144 = vector.extract_strided_slice %126 {offsets = [0, 256], sizes = [8, 128], strides = [1, 1]} : vector<8x384xf32> to vector<8x128xf32>
    %145 = arith.addf %144, %10 : vector<8x128xf32>
    %146 = arith.mulf %145, %134 : vector<8x128xf32>
    %147 = arith.addf %143, %146 : vector<8x128xf32>
    %148 = math.tanh %147 : vector<8x128xf32>
    %149 = arith.subf %123, %148 : vector<8x128xf32>
    %150 = arith.mulf %142, %149 : vector<8x128xf32>
    %151 = arith.addf %148, %150 : vector<8x128xf32>
    %152 = vector.extract_strided_slice %7 {offsets = [40, 0], sizes = [8, 384], strides = [1, 1]} : vector<64x384xf32> to vector<8x384xf32>
    %c0_32 = arith.constant 0 : index
    %c0_33 = arith.constant 0 : index
    %153 = vector.load %arg4[%c0_32, %c0_33] : memref<128x384xf32, #tpu.memory_space<vmem>>, vector<128x384xf32>
    %cst_34 = arith.constant dense<0.000000e+00> : vector<8x384xf32>
    %154 = tpu.matmul %151, %153, %cst_34 {dimension_numbers = #tpu.dot_dimension_numbers<[1], [0], [0], [1], [0, 0, 1, 1], [], []>} : vector<8x128xf32>, vector<128x384xf32>, vector<8x384xf32> -> vector<8x384xf32>
    %155 = vector.extract_strided_slice %152 {offsets = [0, 0], sizes = [8, 128], strides = [1, 1]} : vector<8x384xf32> to vector<8x128xf32>
    %156 = vector.extract_strided_slice %154 {offsets = [0, 0], sizes = [8, 128], strides = [1, 1]} : vector<8x384xf32> to vector<8x128xf32>
    %157 = arith.addf %155, %156 : vector<8x128xf32>
    %158 = arith.negf %157 : vector<8x128xf32>
    %159 = math.exp %158 : vector<8x128xf32>
    %cst_35 = arith.constant 1.000000e+00 : f32
    %160 = vector.broadcast %cst_35 : f32 to vector<8x128xf32>
    %161 = arith.addf %160, %159 : vector<8x128xf32>
    %162 = arith.divf %160, %161 : vector<8x128xf32>
    %163 = vector.extract_strided_slice %152 {offsets = [0, 128], sizes = [8, 128], strides = [1, 1]} : vector<8x384xf32> to vector<8x128xf32>
    %164 = vector.extract_strided_slice %154 {offsets = [0, 128], sizes = [8, 128], strides = [1, 1]} : vector<8x384xf32> to vector<8x128xf32>
    %165 = arith.addf %163, %164 : vector<8x128xf32>
    %166 = arith.negf %165 : vector<8x128xf32>
    %167 = math.exp %166 : vector<8x128xf32>
    %cst_36 = arith.constant 1.000000e+00 : f32
    %168 = vector.broadcast %cst_36 : f32 to vector<8x128xf32>
    %169 = arith.addf %168, %167 : vector<8x128xf32>
    %170 = arith.divf %168, %169 : vector<8x128xf32>
    %171 = vector.extract_strided_slice %152 {offsets = [0, 256], sizes = [8, 128], strides = [1, 1]} : vector<8x384xf32> to vector<8x128xf32>
    %172 = vector.extract_strided_slice %154 {offsets = [0, 256], sizes = [8, 128], strides = [1, 1]} : vector<8x384xf32> to vector<8x128xf32>
    %173 = arith.addf %172, %10 : vector<8x128xf32>
    %174 = arith.mulf %173, %162 : vector<8x128xf32>
    %175 = arith.addf %171, %174 : vector<8x128xf32>
    %176 = math.tanh %175 : vector<8x128xf32>
    %177 = arith.subf %151, %176 : vector<8x128xf32>
    %178 = arith.mulf %170, %177 : vector<8x128xf32>
    %179 = arith.addf %176, %178 : vector<8x128xf32>
    %180 = vector.extract_strided_slice %7 {offsets = [48, 0], sizes = [8, 384], strides = [1, 1]} : vector<64x384xf32> to vector<8x384xf32>
    %c0_37 = arith.constant 0 : index
    %c0_38 = arith.constant 0 : index
    %181 = vector.load %arg4[%c0_37, %c0_38] : memref<128x384xf32, #tpu.memory_space<vmem>>, vector<128x384xf32>
    %cst_39 = arith.constant dense<0.000000e+00> : vector<8x384xf32>
    %182 = tpu.matmul %179, %181, %cst_39 {dimension_numbers = #tpu.dot_dimension_numbers<[1], [0], [0], [1], [0, 0, 1, 1], [], []>} : vector<8x128xf32>, vector<128x384xf32>, vector<8x384xf32> -> vector<8x384xf32>
    %183 = vector.extract_strided_slice %180 {offsets = [0, 0], sizes = [8, 128], strides = [1, 1]} : vector<8x384xf32> to vector<8x128xf32>
    %184 = vector.extract_strided_slice %182 {offsets = [0, 0], sizes = [8, 128], strides = [1, 1]} : vector<8x384xf32> to vector<8x128xf32>
    %185 = arith.addf %183, %184 : vector<8x128xf32>
    %186 = arith.negf %185 : vector<8x128xf32>
    %187 = math.exp %186 : vector<8x128xf32>
    %cst_40 = arith.constant 1.000000e+00 : f32
    %188 = vector.broadcast %cst_40 : f32 to vector<8x128xf32>
    %189 = arith.addf %188, %187 : vector<8x128xf32>
    %190 = arith.divf %188, %189 : vector<8x128xf32>
    %191 = vector.extract_strided_slice %180 {offsets = [0, 128], sizes = [8, 128], strides = [1, 1]} : vector<8x384xf32> to vector<8x128xf32>
    %192 = vector.extract_strided_slice %182 {offsets = [0, 128], sizes = [8, 128], strides = [1, 1]} : vector<8x384xf32> to vector<8x128xf32>
    %193 = arith.addf %191, %192 : vector<8x128xf32>
    %194 = arith.negf %193 : vector<8x128xf32>
    %195 = math.exp %194 : vector<8x128xf32>
    %cst_41 = arith.constant 1.000000e+00 : f32
    %196 = vector.broadcast %cst_41 : f32 to vector<8x128xf32>
    %197 = arith.addf %196, %195 : vector<8x128xf32>
    %198 = arith.divf %196, %197 : vector<8x128xf32>
    %199 = vector.extract_strided_slice %180 {offsets = [0, 256], sizes = [8, 128], strides = [1, 1]} : vector<8x384xf32> to vector<8x128xf32>
    %200 = vector.extract_strided_slice %182 {offsets = [0, 256], sizes = [8, 128], strides = [1, 1]} : vector<8x384xf32> to vector<8x128xf32>
    %201 = arith.addf %200, %10 : vector<8x128xf32>
    %202 = arith.mulf %201, %190 : vector<8x128xf32>
    %203 = arith.addf %199, %202 : vector<8x128xf32>
    %204 = math.tanh %203 : vector<8x128xf32>
    %205 = arith.subf %179, %204 : vector<8x128xf32>
    %206 = arith.mulf %198, %205 : vector<8x128xf32>
    %207 = arith.addf %204, %206 : vector<8x128xf32>
    %208 = vector.extract_strided_slice %7 {offsets = [56, 0], sizes = [8, 384], strides = [1, 1]} : vector<64x384xf32> to vector<8x384xf32>
    %c0_42 = arith.constant 0 : index
    %c0_43 = arith.constant 0 : index
    %209 = vector.load %arg4[%c0_42, %c0_43] : memref<128x384xf32, #tpu.memory_space<vmem>>, vector<128x384xf32>
    %cst_44 = arith.constant dense<0.000000e+00> : vector<8x384xf32>
    %210 = tpu.matmul %207, %209, %cst_44 {dimension_numbers = #tpu.dot_dimension_numbers<[1], [0], [0], [1], [0, 0, 1, 1], [], []>} : vector<8x128xf32>, vector<128x384xf32>, vector<8x384xf32> -> vector<8x384xf32>
    %211 = vector.extract_strided_slice %208 {offsets = [0, 0], sizes = [8, 128], strides = [1, 1]} : vector<8x384xf32> to vector<8x128xf32>
    %212 = vector.extract_strided_slice %210 {offsets = [0, 0], sizes = [8, 128], strides = [1, 1]} : vector<8x384xf32> to vector<8x128xf32>
    %213 = arith.addf %211, %212 : vector<8x128xf32>
    %214 = arith.negf %213 : vector<8x128xf32>
    %215 = math.exp %214 : vector<8x128xf32>
    %cst_45 = arith.constant 1.000000e+00 : f32
    %216 = vector.broadcast %cst_45 : f32 to vector<8x128xf32>
    %217 = arith.addf %216, %215 : vector<8x128xf32>
    %218 = arith.divf %216, %217 : vector<8x128xf32>
    %219 = vector.extract_strided_slice %208 {offsets = [0, 128], sizes = [8, 128], strides = [1, 1]} : vector<8x384xf32> to vector<8x128xf32>
    %220 = vector.extract_strided_slice %210 {offsets = [0, 128], sizes = [8, 128], strides = [1, 1]} : vector<8x384xf32> to vector<8x128xf32>
    %221 = arith.addf %219, %220 : vector<8x128xf32>
    %222 = arith.negf %221 : vector<8x128xf32>
    %223 = math.exp %222 : vector<8x128xf32>
    %cst_46 = arith.constant 1.000000e+00 : f32
    %224 = vector.broadcast %cst_46 : f32 to vector<8x128xf32>
    %225 = arith.addf %224, %223 : vector<8x128xf32>
    %226 = arith.divf %224, %225 : vector<8x128xf32>
    %227 = vector.extract_strided_slice %208 {offsets = [0, 256], sizes = [8, 128], strides = [1, 1]} : vector<8x384xf32> to vector<8x128xf32>
    %228 = vector.extract_strided_slice %210 {offsets = [0, 256], sizes = [8, 128], strides = [1, 1]} : vector<8x384xf32> to vector<8x128xf32>
    %229 = arith.addf %228, %10 : vector<8x128xf32>
    %230 = arith.mulf %229, %218 : vector<8x128xf32>
    %231 = arith.addf %227, %230 : vector<8x128xf32>
    %232 = math.tanh %231 : vector<8x128xf32>
    %233 = arith.subf %207, %232 : vector<8x128xf32>
    %234 = arith.mulf %226, %233 : vector<8x128xf32>
    %235 = arith.addf %232, %234 : vector<8x128xf32>
    %c0_47 = arith.constant 0 : index
    %c0_48 = arith.constant 0 : index
    %236 = vector.load %arg6[%c0_47, %c0_48] : memref<128x2xf32, #tpu.memory_space<vmem>>, vector<128x2xf32>
    %cst_49 = arith.constant dense<0.000000e+00> : vector<8x2xf32>
    %237 = tpu.matmul %235, %236, %cst_49 {dimension_numbers = #tpu.dot_dimension_numbers<[1], [0], [0], [1], [0, 0, 1, 1], [], []>} : vector<8x128xf32>, vector<128x2xf32>, vector<8x2xf32> -> vector<8x2xf32>
    %c0_50 = arith.constant 0 : index
    %c0_51 = arith.constant 0 : index
    %238 = vector.load %arg7[%c0_50, %c0_51] : memref<1x2xf32, #tpu.memory_space<vmem>>, vector<1x2xf32>
    %239 = vector.broadcast %238 : vector<1x2xf32> to vector<8x2xf32>
    %240 = arith.addf %237, %239 : vector<8x2xf32>
    %cst_52 = arith.constant dense<0xFF800000> : vector<8xf32>
    %241 = vector.multi_reduction <maximumf>, %240, %cst_52 [1] : vector<8x2xf32> to vector<8xf32>
    %242 = vector.shape_cast %241 : vector<8xf32> to vector<8x1xf32>
    %243 = vector.broadcast %242 : vector<8x1xf32> to vector<8x2xf32>
    %244 = arith.subf %240, %243 : vector<8x2xf32>
    %245 = math.exp %244 : vector<8x2xf32>
    %cst_53 = arith.constant dense<0.000000e+00> : vector<8xf32>
    %246 = vector.multi_reduction <add>, %245, %cst_53 [1] : vector<8x2xf32> to vector<8xf32>
    %247 = vector.shape_cast %246 : vector<8xf32> to vector<8x1xf32>
    %248 = vector.broadcast %247 : vector<8x1xf32> to vector<8x2xf32>
    %249 = arith.divf %245, %248 : vector<8x2xf32>
    %250 = vector.extract_strided_slice %249 {offsets = [0, 0], sizes = [2, 2], strides = [1, 1]} : vector<8x2xf32> to vector<2x2xf32>
    %c0_54 = arith.constant 0 : index
    %c0_55 = arith.constant 0 : index
    %251 = vector.load %arg8[%c0_54, %c0_55] : memref<2x2xf32, #tpu.memory_space<vmem>>, vector<2x2xf32>
    tpu.vector_store %arg8[%c0_54, %c0_55], %250 {strides = array<i32>} : memref<2x2xf32, #tpu.memory_space<vmem>>, vector<2x2xf32>,
    return
  }
  func.func @transform_0(%arg0: i32) -> (i32, i32) {
    %c0_i32 = arith.constant 0 : i32
    %c0_i32_0 = arith.constant 0 : i32
    %c0_i32_1 = arith.constant 0 : i32
    return %c0_i32, %c0_i32_0 : i32, i32
  }
  func.func @transform_1(%arg0: i32) -> (i32, i32) {
    %c0_i32 = arith.constant 0 : i32
    %c0_i32_0 = arith.constant 0 : i32
    %c0_i32_1 = arith.constant 0 : i32
    return %c0_i32, %c0_i32_0 : i32, i32
  }
  func.func @transform_2(%arg0: i32) -> (i32, i32) {
    %c0_i32 = arith.constant 0 : i32
    %c0_i32_0 = arith.constant 0 : i32
    %c0_i32_1 = arith.constant 0 : i32
    return %c0_i32, %c0_i32_0 : i32, i32
  }
  func.func @transform_3(%arg0: i32) -> (i32, i32) {
    %c0_i32 = arith.constant 0 : i32
    %c0_i32_0 = arith.constant 0 : i32
    %c0_i32_1 = arith.constant 0 : i32
    return %c0_i32, %c0_i32_0 : i32, i32
  }
  func.func @transform_4(%arg0: i32) -> (i32, i32) {
    %c0_i32 = arith.constant 0 : i32
    %c0_i32_0 = arith.constant 0 : i32
    %c0_i32_1 = arith.constant 0 : i32
    return %c0_i32, %c0_i32_0 : i32, i32
  }
  func.func @transform_5(%arg0: i32) -> (i32, i32) {
    %c0_i32 = arith.constant 0 : i32
    %c0_i32_0 = arith.constant 0 : i32
    %c0_i32_1 = arith.constant 0 : i32
    return %c0_i32, %c0_i32_0 : i32, i32
  }
  func.func @transform_6(%arg0: i32) -> (i32, i32) {
    %c0_i32 = arith.constant 0 : i32
    %c0_i32_0 = arith.constant 0 : i32
    %c0_i32_1 = arith.constant 0 : i32
    return %c0_i32, %c0_i32_0 : i32, i32
  }
  func.func @transform_7(%arg0: i32) -> (i32, i32) {
    %c0_i32 = arith.constant 0 : i32
    %c0_i32_0 = arith.constant 0 : i32
    %c0_i32_1 = arith.constant 0 : i32
    return %c0_i32, %c0_i32_0 : i32, i32
  }
}

</mosaic_0001>

<llo_original>
// kernel: rnn_model_forward.1
$region0: #{rnn_model_forward.1}
  #allocation0 [shape = 'u32[]', space=smem, size = 0x4, offset = 0x4, fixed_abs, tag = 'smem constant byte address 0x4 - core index']
  #allocation1 [shape = 'u32[144,128]{1,0:T(1,128)}', space=vmem, size = 0x12000, scoped, tag = 'internal scratch']
  %s0 = inlined_call_operand.vmem [shape: s32[64,1], index: 0, kind: input, shape index: {}]
  %s1 = inlined_call_operand.hbm [shape: f32[128,384], index: 1, kind: input, shape index: {}]
  %s2 = inlined_call_operand.vmem [shape: f32[8,128], index: 2, kind: input, shape index: {}]
  %s3 = inlined_call_operand.hbm [shape: f32[128,384], index: 3, kind: input, shape index: {}]
  %s4 = inlined_call_operand.vmem [shape: f32[1,128], index: 4, kind: input, shape index: {}]
  %s5 = inlined_call_operand.vmem [shape: f32[128,2], index: 5, kind: input, shape index: {}]
  %s6 = inlined_call_operand.vmem [shape: f32[1,2], index: 6, kind: input, shape index: {}]
  %s7 = inlined_call_operand.hbm [shape: f32[2,2], index: 7, kind: output, shape index: {}]
  %s8 = sld [smem:[#allocation0]]
  $region46: #{rnn_model_forward.1} parent=0
    _
  %s10 = ssub.s32 1, %s8
  %s11 = scalar_select 0, %s10, %s8
  $region1: #{rnn_model_forward.1} parent=0
    #allocation2 [shape = 'u8[196608]{0}', space=vmem, size = 0x30000, scoped, tag = 'input window, operand 1, single buffered']
    #allocation3 [shape = 's32[1]{0}', space=sflag, size = 0x4, scoped, tag = 'scoped memory for rnn_model_forward.1']
    #allocation4 [shape = 's32[1]{0}', space=sflag, size = 0x4, scoped, tag = 'scoped memory for rnn_model_forward.1']
    #allocation5 [shape = 'u8[196608]{0}', space=vmem, size = 0x30000, scoped, tag = 'input window, operand 3, single buffered']
    #allocation6 [shape = 's32[1]{0}', space=sflag, size = 0x4, scoped, tag = 'scoped memory for rnn_model_forward.1']
    #allocation7 [shape = 'u8[1024]{0}', space=vmem, size = 0x400, scoped, tag = 'output window, operand 0, single buffered']
    %12 = vsyncpa [#allocation3], 0
    %13 = vsyncpa [#allocation6], 0
    %14 = vsyncpa [#allocation4], 0
    // Predicated region
    $region2: #{rnn_model_forward.1} parent=1 // pred_check
      _
    $region3: #{rnn_model_forward.1} parent=1 // pred_check_branch
      %16 = sbr.rel (0) target = $region5
    $region4: #{rnn_model_forward.1} parent=1 // pred_region
      _
    $region5: #{rnn_model_forward.1} parent=1 // pred_fallthru
      _
    // Predicated region
    $region6: #{rnn_model_forward.1} parent=1 // pred_check
      _
    $region7: #{rnn_model_forward.1} parent=1 // pred_check_branch
      %18 = sbr.rel (0) target = $region9
    $region8: #{rnn_model_forward.1} parent=1 // pred_region
      %s20 = ssub.s32 6144, 6144
      %21 = vsyncadd [#allocation3], %s20
      %s22 = sshll.u32 [#allocation2], 4
      %s23 = int_to_ptr.vmem [resolvable:$true] %s22
      %28 = dma.hbm_to_vmem [thread:$0]  %s1, 6144, %s23, [#allocation3], 384, 384, 24
    $region9: #{rnn_model_forward.1} parent=1 // pred_fallthru
      _
    // Predicated region
    $region10: #{rnn_model_forward.1} parent=1 // pred_check
      _
    $region11: #{rnn_model_forward.1} parent=1 // pred_check_branch
      %30 = sbr.rel (0) target = $region13
    $region12: #{rnn_model_forward.1} parent=1 // pred_region
      _
    $region13: #{rnn_model_forward.1} parent=1 // pred_fallthru
      _
    // Predicated region
    $region14: #{rnn_model_forward.1} parent=1 // pred_check
      _
    $region15: #{rnn_model_forward.1} parent=1 // pred_check_branch
      %32 = sbr.rel (0) target = $region17
    $region16: #{rnn_model_forward.1} parent=1 // pred_region
      %s34 = ssub.s32 6144, 6144
      %35 = vsyncadd [#allocation6], %s34
      %s36 = sshll.u32 [#allocation5], 4
      %s37 = int_to_ptr.vmem [resolvable:$true] %s36
      %42 = dma.hbm_to_vmem [thread:$0]  %s3, 6144, %s37, [#allocation6], 384, 384, 24
    $region17: #{rnn_model_forward.1} parent=1 // pred_fallthru
      _
    // Predicated region
    $region18: #{rnn_model_forward.1} parent=1 // pred_check
      _
    $region19: #{rnn_model_forward.1} parent=1 // pred_check_branch
      %44 = sbr.rel (0) target = $region21
    $region20: #{rnn_model_forward.1} parent=1 // pred_region
      _
    $region21: #{rnn_model_forward.1} parent=1 // pred_fallthru
      _
    // Predicated region
    $region22: #{rnn_model_forward.1} parent=1 // pred_check
      _
    $region23: #{rnn_model_forward.1} parent=1 // pred_check_branch
      %46 = sbr.rel (0) target = $region25
    $region24: #{rnn_model_forward.1} parent=1 // pred_region
      _
    $region25: #{rnn_model_forward.1} parent=1 // pred_fallthru
      _
    // Predicated region
    $region26: #{rnn_model_forward.1} parent=1 // pred_check
      _
    $region27: #{rnn_model_forward.1} parent=1 // pred_check_branch
      %48 = sbr.rel (0) target = $region29
    $region28: #{rnn_model_forward.1} parent=1 // pred_region
      _
    $region29: #{rnn_model_forward.1} parent=1 // pred_fallthru
      _
    // Predicated region
    $region30: #{rnn_model_forward.1} parent=1 // pred_check
      _
    $region31: #{rnn_model_forward.1} parent=1 // pred_check_branch
      %50 = sbr.rel (0) target = $region33
    $region32: #{rnn_model_forward.1} parent=1 // pred_region
      %51 = dma.done [#allocation3], 6144
    $region33: #{rnn_model_forward.1} parent=1 // pred_fallthru
      _
    // Predicated region
    $region34: #{rnn_model_forward.1} parent=1 // pred_check
      _
    $region35: #{rnn_model_forward.1} parent=1 // pred_check_branch
      %53 = sbr.rel (0) target = $region37
    $region36: #{rnn_model_forward.1} parent=1 // pred_region
      %54 = dma.done [#allocation6], 6144
    $region37: #{rnn_model_forward.1} parent=1 // pred_fallthru
      _
    %v55 = vld [vmem:[%s0] sm:$0xff]
    %v56 = vld [vmem:[%s0 + $0x8] sm:$0xff]
    %v57 = vld [vmem:[%s0 + $0x10] sm:$0xff]
    %v58 = vld [vmem:[%s0 + $0x18] sm:$0xff]
    %v59 = vld [vmem:[%s0 + $0x20] sm:$0xff]
    %v60 = vld [vmem:[%s0 + $0x28] sm:$0xff]
    %v61 = vld [vmem:[%s0 + $0x30] sm:$0xff]
    %v62 = vld [vmem:[%s0 + $0x38] sm:$0xff]
    %v63 = vlaneseq
    %v64 = vand.u32 %v63, 127
    %65 = vset.pattern.permute.xlu0 0
    %66 = vperm.xlu0 %65, %v55
    %v67 = vpop.permute.xlu0 %66
    %68 = vset.pattern.permute.xlu0 0
    %69 = vperm.xlu0 %68, %v56
    %v70 = vpop.permute.xlu0 %69
    %71 = vset.pattern.permute.xlu0 0
    %72 = vperm.xlu0 %71, %v57
    %v73 = vpop.permute.xlu0 %72
    %74 = vset.pattern.permute.xlu0 0
    %75 = vperm.xlu0 %74, %v58
    %v76 = vpop.permute.xlu0 %75
    %77 = vset.pattern.permute.xlu0 0
    %78 = vperm.xlu0 %77, %v59
    %v79 = vpop.permute.xlu0 %78
    %80 = vset.pattern.permute.xlu0 0
    %81 = vperm.xlu0 %80, %v60
    %v82 = vpop.permute.xlu0 %81
    %83 = vset.pattern.permute.xlu0 0
    %84 = vperm.xlu0 %83, %v61
    %v85 = vpop.permute.xlu0 %84
    %86 = vset.pattern.permute.xlu0 0
    %87 = vperm.xlu0 %86, %v62
    %v88 = vpop.permute.xlu0 %87
    %vm89 = vcmp.eq.s32.totalorder %v64, %v67
    %vm90 = vcmp.eq.s32.totalorder %v64, %v70
    %vm91 = vcmp.eq.s32.totalorder %v64, %v73
    %vm92 = vcmp.eq.s32.totalorder %v64, %v76
    %vm93 = vcmp.eq.s32.totalorder %v64, %v79
    %vm94 = vcmp.eq.s32.totalorder %v64, %v82
    %vm95 = vcmp.eq.s32.totalorder %v64, %v85
    %vm96 = vcmp.eq.s32.totalorder %v64, %v88
    %v97 = vsel %vm89, 1, 0
    %v98 = vsel %vm90, 1, 0
    %v99 = vsel %vm91, 1, 0
    %v100 = vsel %vm92, 1, 0
    %v101 = vsel %vm93, 1, 0
    %v102 = vsel %vm94, 1, 0
    %v103 = vsel %vm95, 1, 0
    %v104 = vsel %vm96, 1, 0
    %v105 = vcvt.s32.f32 %v97
    %v106 = vcvt.s32.f32 %v98
    %v107 = vcvt.s32.f32 %v99
    %v108 = vcvt.s32.f32 %v100
    %v109 = vcvt.s32.f32 %v101
    %v110 = vcvt.s32.f32 %v102
    %v111 = vcvt.s32.f32 %v103
    %v112 = vcvt.s32.f32 %v104
    %v113 = vld [vmem:[#allocation2] sm:$0xff]
    %v114 = vld [vmem:[#allocation2 + $0x8] sm:$0xff]
    %v115 = vld [vmem:[#allocation2 + $0x10] sm:$0xff]
    %v116 = vld [vmem:[#allocation2 + $0x18] sm:$0xff]
    %v117 = vld [vmem:[#allocation2 + $0x20] sm:$0xff]
    %v118 = vld [vmem:[#allocation2 + $0x28] sm:$0xff]
    %v119 = vld [vmem:[#allocation2 + $0x30] sm:$0xff]
    %v120 = vld [vmem:[#allocation2 + $0x38] sm:$0xff]
    %v121 = vld [vmem:[#allocation2 + $0x40] sm:$0xff]
    %v122 = vld [vmem:[#allocation2 + $0x48] sm:$0xff]
    %v123 = vld [vmem:[#allocation2 + $0x50] sm:$0xff]
    %v124 = vld [vmem:[#allocation2 + $0x58] sm:$0xff]
    %v125 = vld [vmem:[#allocation2 + $0x60] sm:$0xff]
    %v126 = vld [vmem:[#allocation2 + $0x68] sm:$0xff]
    %v127 = vld [vmem:[#allocation2 + $0x70] sm:$0xff]
    %v128 = vld [vmem:[#allocation2 + $0x78] sm:$0xff]
    %v129 = vld [vmem:[#allocation2 + $0x80] sm:$0xff]
    %v130 = vld [vmem:[#allocation2 + $0x88] sm:$0xff]
    %v131 = vld [vmem:[#allocation2 + $0x90] sm:$0xff]
    %v132 = vld [vmem:[#allocation2 + $0x98] sm:$0xff]
    %v133 = vld [vmem:[#allocation2 + $0xa0] sm:$0xff]
    %v134 = vld [vmem:[#allocation2 + $0xa8] sm:$0xff]
    %v135 = vld [vmem:[#allocation2 + $0xb0] sm:$0xff]
    %v136 = vld [vmem:[#allocation2 + $0xb8] sm:$0xff]
    %v137 = vld [vmem:[#allocation2 + $0xc0] sm:$0xff]
    %v138 = vld [vmem:[#allocation2 + $0xc8] sm:$0xff]
    %v139 = vld [vmem:[#allocation2 + $0xd0] sm:$0xff]
    %v140 = vld [vmem:[#allocation2 + $0xd8] sm:$0xff]
    %v141 = vld [vmem:[#allocation2 + $0xe0] sm:$0xff]
    %v142 = vld [vmem:[#allocation2 + $0xe8] sm:$0xff]
    %v143 = vld [vmem:[#allocation2 + $0xf0] sm:$0xff]
    %v144 = vld [vmem:[#allocation2 + $0xf8] sm:$0xff]
    %v145 = vld [vmem:[#allocation2 + $0x100] sm:$0xff]
    %v146 = vld [vmem:[#allocation2 + $0x108] sm:$0xff]
    %v147 = vld [vmem:[#allocation2 + $0x110] sm:$0xff]
    %v148 = vld [vmem:[#allocation2 + $0x118] sm:$0xff]
    %v149 = vld [vmem:[#allocation2 + $0x120] sm:$0xff]
    %v150 = vld [vmem:[#allocation2 + $0x128] sm:$0xff]
    %v151 = vld [vmem:[#allocation2 + $0x130] sm:$0xff]
    %v152 = vld [vmem:[#allocation2 + $0x138] sm:$0xff]
    %v153 = vld [vmem:[#allocation2 + $0x140] sm:$0xff]
    %v154 = vld [vmem:[#allocation2 + $0x148] sm:$0xff]
    %v155 = vld [vmem:[#allocation2 + $0x150] sm:$0xff]
    %v156 = vld [vmem:[#allocation2 + $0x158] sm:$0xff]
    %v157 = vld [vmem:[#allocation2 + $0x160] sm:$0xff]
    %v158 = vld [vmem:[#allocation2 + $0x168] sm:$0xff]
    %v159 = vld [vmem:[#allocation2 + $0x170] sm:$0xff]
    %v160 = vld [vmem:[#allocation2 + $0x178] sm:$0xff]
    %161 = vmatprep.subr.mxu0 %v114
    %162 = vmatpush1.msra.mxu0 %v113
    %163 = vmatprep.subr.mxu0 %v117
    %164 = vmatpush1.msra.mxu0 %v116
    %165 = vmatprep.subr.mxu0 %v120
    %166 = vmatpush1.msra.mxu0 %v119
    %167 = vmatprep.subr.mxu0 %v123
    %168 = vmatpush1.msra.mxu0 %v122
    %169 = vmatprep.subr.mxu0 %v126
    %170 = vmatpush1.msra.mxu0 %v125
    %171 = vmatprep.subr.mxu0 %v129
    %172 = vmatpush1.msra.mxu0 %v128
    %173 = vmatprep.subr.mxu0 %v132
    %174 = vmatpush1.msra.mxu0 %v131
    %175 = vmatprep.subr.mxu0 %v135
    %176 = vmatpush1.msra.mxu0 %v134
    %177 = vmatprep.subr.mxu0 %v138
    %178 = vmatpush1.msra.mxu0 %v137
    %179 = vmatprep.subr.mxu0 %v141
    %180 = vmatpush1.msra.mxu0 %v140
    %181 = vmatprep.subr.mxu0 %v144
    %182 = vmatpush1.msra.mxu0 %v143
    %183 = vmatprep.subr.mxu0 %v147
    %184 = vmatpush1.msra.mxu0 %v146
    %185 = vmatprep.subr.mxu0 %v150
    %186 = vmatpush1.msra.mxu0 %v149
    %187 = vmatprep.subr.mxu0 %v153
    %188 = vmatpush1.msra.mxu0 %v152
    %189 = vmatprep.subr.mxu0 %v156
    %190 = vmatpush1.msra.mxu0 %v155
    %191 = vmatprep.subr.mxu0 %v159
    %192 = vmatpush1.msra.mxu0 %v158
    %193 = vmatprep.subr.mxu0 0.0
    %194 = vmatpush1.msra.mxu0 0.0
    %195 = vmatprep.subr.mxu0 0.0
    %196 = vmatpush1.msra.mxu0 0.0
    %197 = vmatprep.subr.mxu0 0.0
    %198 = vmatpush1.msra.mxu0 0.0
    %199 = vmatprep.subr.mxu0 0.0
    %200 = vmatpush1.msra.mxu0 0.0
    %201 = vmatprep.subr.mxu0 0.0
    %202 = vmatpush1.msra.mxu0 0.0
    %203 = vmatprep.subr.mxu0 0.0
    %204 = vmatpush1.msra.mxu0 0.0
    %205 = vmatprep.subr.mxu0 0.0
    %206 = vmatpush1.msra.mxu0 0.0
    %207 = vmatprep.subr.mxu0 0.0
    %208 = vmatpush1.msra.mxu0 0.0
    %209 = vmatprep.subr.mxu0 0.0
    %210 = vmatpush1.msra.mxu0 0.0
    %211 = vmatprep.subr.mxu0 0.0
    %212 = vmatpush1.msra.mxu0 0.0
    %213 = vmatprep.subr.mxu0 0.0
    %214 = vmatpush1.msra.mxu0 0.0
    %215 = vmatprep.subr.mxu0 0.0
    %216 = vmatpush1.msra.mxu0 0.0
    %217 = vmatprep.subr.mxu0 0.0
    %218 = vmatpush1.msra.mxu0 0.0
    %219 = vmatprep.subr.mxu0 0.0
    %220 = vmatpush1.msra.mxu0 0.0
    %221 = vmatprep.subr.mxu0 0.0
    %222 = vmatpush1.msra.mxu0 0.0
    %223 = vmatprep.subr.mxu0 0.0
    %224 = vmatpush1.msra.mxu0 0.0
    %225 = vmatprep.mubr.f32.mxu0 0.0
    %226 = vmatmul.mubr.f32.gmra.mrb[0].mxu0 %v105
    %v227 = vpop.f32.mrb[0].mxu0
    %v228 = vadd.f32 0.0, %v227
    %v229 = vpop.f32.mrb[0].mxu0
    %v230 = vadd.f32 0.0, %v229
    %231 = vmatprep.mubr.f32.mxu0 0.0
    %232 = vmatmul.mubr.f32.gmra.mrb[0].mxu0 %v106
    %v233 = vpop.f32.mrb[0].mxu0
    %v234 = vadd.f32 0.0, %v233
    %v235 = vpop.f32.mrb[0].mxu0
    %v236 = vadd.f32 0.0, %v235
    %237 = vmatprep.mubr.f32.mxu0 0.0
    %238 = vmatmul.mubr.f32.gmra.mrb[0].mxu0 %v107
    %v239 = vpop.f32.mrb[0].mxu0
    %v240 = vadd.f32 0.0, %v239
    %v241 = vpop.f32.mrb[0].mxu0
    %v242 = vadd.f32 0.0, %v241
    %243 = vmatprep.mubr.f32.mxu0 0.0
    %244 = vmatmul.mubr.f32.gmra.mrb[0].mxu0 %v108
    %v245 = vpop.f32.mrb[0].mxu0
    %v246 = vadd.f32 0.0, %v245
    %v247 = vpop.f32.mrb[0].mxu0
    %v248 = vadd.f32 0.0, %v247
    %249 = vmatprep.mubr.f32.mxu0 0.0
    %250 = vmatmul.mubr.f32.gmra.mrb[0].mxu0 %v109
    %v251 = vpop.f32.mrb[0].mxu0
    %v252 = vadd.f32 0.0, %v251
    %v253 = vpop.f32.mrb[0].mxu0
    %v254 = vadd.f32 0.0, %v253
    %255 = vmatprep.mubr.f32.mxu0 0.0
    %256 = vmatmul.mubr.f32.gmra.mrb[0].mxu0 %v110
    %v257 = vpop.f32.mrb[0].mxu0
    %v258 = vadd.f32 0.0, %v257
    %v259 = vpop.f32.mrb[0].mxu0
    %v260 = vadd.f32 0.0, %v259
    %261 = vmatprep.mubr.f32.mxu0 0.0
    %262 = vmatmul.mubr.f32.gmra.mrb[0].mxu0 %v111
    %v263 = vpop.f32.mrb[0].mxu0
    %v264 = vadd.f32 0.0, %v263
    %v265 = vpop.f32.mrb[0].mxu0
    %v266 = vadd.f32 0.0, %v265
    %267 = vmatprep.mubr.f32.mxu0 0.0
    %268 = vmatmul.mubr.f32.gmra.mrb[0].mxu0 %v112
    %v269 = vpop.f32.mrb[0].mxu0
    %v270 = vadd.f32 0.0, %v269
    %v271 = vpop.f32.mrb[0].mxu0
    %v272 = vadd.f32 0.0, %v271
    %273 = vdwg.mxu0
    %274 = vmatprep.subr.mxu0 0.0
    %275 = vmatpush1.msra.mxu0 %v115
    %276 = vmatprep.subr.mxu0 0.0
    %277 = vmatpush1.msra.mxu0 %v118
    %278 = vmatprep.subr.mxu0 0.0
    %279 = vmatpush1.msra.mxu0 %v121
    %280 = vmatprep.subr.mxu0 0.0
    %281 = vmatpush1.msra.mxu0 %v124
    %282 = vmatprep.subr.mxu0 0.0
    %283 = vmatpush1.msra.mxu0 %v127
    %284 = vmatprep.subr.mxu0 0.0
    %285 = vmatpush1.msra.mxu0 %v130
    %286 = vmatprep.subr.mxu0 0.0
    %287 = vmatpush1.msra.mxu0 %v133
    %288 = vmatprep.subr.mxu0 0.0
    %289 = vmatpush1.msra.mxu0 %v136
    %290 = vmatprep.subr.mxu0 0.0
    %291 = vmatpush1.msra.mxu0 %v139
    %292 = vmatprep.subr.mxu0 0.0
    %293 = vmatpush1.msra.mxu0 %v142
    %294 = vmatprep.subr.mxu0 0.0
    %295 = vmatpush1.msra.mxu0 %v145
    %296 = vmatprep.subr.mxu0 0.0
    %297 = vmatpush1.msra.mxu0 %v148
    %298 = vmatprep.subr.mxu0 0.0
    %299 = vmatpush1.msra.mxu0 %v151
    %300 = vmatprep.subr.mxu0 0.0
    %301 = vmatpush1.msra.mxu0 %v154
    %302 = vmatprep.subr.mxu0 0.0
    %303 = vmatpush1.msra.mxu0 %v157
    %304 = vmatprep.subr.mxu0 0.0
    %305 = vmatpush1.msra.mxu0 %v160
    %306 = vmatprep.subr.mxu0 0.0
    %307 = vmatpush1.msra.mxu0 0.0
    %308 = vmatprep.subr.mxu0 0.0
    %309 = vmatpush1.msra.mxu0 0.0
    %310 = vmatprep.subr.mxu0 0.0
    %311 = vmatpush1.msra.mxu0 0.0
    %312 = vmatprep.subr.mxu0 0.0
    %313 = vmatpush1.msra.mxu0 0.0
    %314 = vmatprep.subr.mxu0 0.0
    %315 = vmatpush1.msra.mxu0 0.0
    %316 = vmatprep.subr.mxu0 0.0
    %317 = vmatpush1.msra.mxu0 0.0
    %318 = vmatprep.subr.mxu0 0.0
    %319 = vmatpush1.msra.mxu0 0.0
    %320 = vmatprep.subr.mxu0 0.0
    %321 = vmatpush1.msra.mxu0 0.0
    %322 = vmatprep.subr.mxu0 0.0
    %323 = vmatpush1.msra.mxu0 0.0
    %324 = vmatprep.subr.mxu0 0.0
    %325 = vmatpush1.msra.mxu0 0.0
    %326 = vmatprep.subr.mxu0 0.0
    %327 = vmatpush1.msra.mxu0 0.0
    %328 = vmatprep.subr.mxu0 0.0
    %329 = vmatpush1.msra.mxu0 0.0
    %330 = vmatprep.subr.mxu0 0.0
    %331 = vmatpush1.msra.mxu0 0.0
    %332 = vmatprep.subr.mxu0 0.0
    %333 = vmatpush1.msra.mxu0 0.0
    %334 = vmatprep.subr.mxu0 0.0
    %335 = vmatpush1.msra.mxu0 0.0
    %336 = vmatprep.subr.mxu0 0.0
    %337 = vmatpush1.msra.mxu0 0.0
    %338 = vmatprep.mubr.f32.mxu0 0.0
    %339 = vmatmul.mubr.f32.gmra.mrb[0].mxu0 %v105
    %v340 = vpop.f32.mrb[0].mxu0
    %v341 = vadd.f32 0.0, %v340
    %v342 = vpop.f32.mrb[0].mxu0
    %343 = vmatprep.mubr.f32.mxu0 0.0
    %344 = vmatmul.mubr.f32.gmra.mrb[0].mxu0 %v106
    %v345 = vpop.f32.mrb[0].mxu0
    %v346 = vadd.f32 0.0, %v345
    %v347 = vpop.f32.mrb[0].mxu0
    %348 = vmatprep.mubr.f32.mxu0 0.0
    %349 = vmatmul.mubr.f32.gmra.mrb[0].mxu0 %v107
    %v350 = vpop.f32.mrb[0].mxu0
    %v351 = vadd.f32 0.0, %v350
    %v352 = vpop.f32.mrb[0].mxu0
    %353 = vmatprep.mubr.f32.mxu0 0.0
    %354 = vmatmul.mubr.f32.gmra.mrb[0].mxu0 %v108
    %v355 = vpop.f32.mrb[0].mxu0
    %v356 = vadd.f32 0.0, %v355
    %v357 = vpop.f32.mrb[0].mxu0
    %358 = vmatprep.mubr.f32.mxu0 0.0
    %359 = vmatmul.mubr.f32.gmra.mrb[0].mxu0 %v109
    %v360 = vpop.f32.mrb[0].mxu0
    %v361 = vadd.f32 0.0, %v360
    %v362 = vpop.f32.mrb[0].mxu0
    %363 = vmatprep.mubr.f32.mxu0 0.0
    %364 = vmatmul.mubr.f32.gmra.mrb[0].mxu0 %v110
    %v365 = vpop.f32.mrb[0].mxu0
    %v366 = vadd.f32 0.0, %v365
    %v367 = vpop.f32.mrb[0].mxu0
    %368 = vmatprep.mubr.f32.mxu0 0.0
    %369 = vmatmul.mubr.f32.gmra.mrb[0].mxu0 %v111
    %v370 = vpop.f32.mrb[0].mxu0
    %v371 = vadd.f32 0.0, %v370
    %v372 = vpop.f32.mrb[0].mxu0
    %373 = vmatprep.mubr.f32.mxu0 0.0
    %374 = vmatmul.mubr.f32.gmra.mrb[0].mxu0 %v112
    %v375 = vpop.f32.mrb[0].mxu0
    %v376 = vadd.f32 0.0, %v375
    %v377 = vpop.f32.mrb[0].mxu0
    %378 = vdwg.mxu0
    %v379 = vld [vmem:[%s4] sm:$0x1]
    %v381 = vlaneseq
    %v382 = vshrl.u32 %v381, 7
    %v383 = vsub.s32 0, %v382
    %v384 = vrot.slane %v379, %v383
    %v386 = vld [vmem:[%s2] sm:$0xff]
    %v387 = vld [vmem:[#allocation5] sm:$0xff]
    %v388 = vld [vmem:[#allocation5 + $0x8] sm:$0xff]
    %v389 = vld [vmem:[#allocation5 + $0x10] sm:$0xff]
    %v390 = vld [vmem:[#allocation5 + $0x18] sm:$0xff]
    %v391 = vld [vmem:[#allocation5 + $0x20] sm:$0xff]
    %v392 = vld [vmem:[#allocation5 + $0x28] sm:$0xff]
    %v393 = vld [vmem:[#allocation5 + $0x30] sm:$0xff]
    %v394 = vld [vmem:[#allocation5 + $0x38] sm:$0xff]
    %v395 = vld [vmem:[#allocation5 + $0x40] sm:$0xff]
    %v396 = vld [vmem:[#allocation5 + $0x48] sm:$0xff]
    %v397 = vld [vmem:[#allocation5 + $0x50] sm:$0xff]
    %v398 = vld [vmem:[#allocation5 + $0x58] sm:$0xff]
    %v399 = vld [vmem:[#allocation5 + $0x60] sm:$0xff]
    %v400 = vld [vmem:[#allocation5 + $0x68] sm:$0xff]
    %v401 = vld [vmem:[#allocation5 + $0x70] sm:$0xff]
    %v402 = vld [vmem:[#allocation5 + $0x78] sm:$0xff]
    %v403 = vld [vmem:[#allocation5 + $0x80] sm:$0xff]
    %v404 = vld [vmem:[#allocation5 + $0x88] sm:$0xff]
    %v405 = vld [vmem:[#allocation5 + $0x90] sm:$0xff]
    %v406 = vld [vmem:[#allocation5 + $0x98] sm:$0xff]
    %v407 = vld [vmem:[#allocation5 + $0xa0] sm:$0xff]
    %v408 = vld [vmem:[#allocation5 + $0xa8] sm:$0xff]
    %v409 = vld [vmem:[#allocation5 + $0xb0] sm:$0xff]
    %v410 = vld [vmem:[#allocation5 + $0xb8] sm:$0xff]
    %v411 = vld [vmem:[#allocation5 + $0xc0] sm:$0xff]
    %v412 = vld [vmem:[#allocation5 + $0xc8] sm:$0xff]
    %v413 = vld [vmem:[#allocation5 + $0xd0] sm:$0xff]
    %v414 = vld [vmem:[#allocation5 + $0xd8] sm:$0xff]
    %v415 = vld [vmem:[#allocation5 + $0xe0] sm:$0xff]
    %v416 = vld [vmem:[#allocation5 + $0xe8] sm:$0xff]
    %v417 = vld [vmem:[#allocation5 + $0xf0] sm:$0xff]
    %v418 = vld [vmem:[#allocation5 + $0xf8] sm:$0xff]
    %v419 = vld [vmem:[#allocation5 + $0x100] sm:$0xff]
    %v420 = vld [vmem:[#allocation5 + $0x108] sm:$0xff]
    %v421 = vld [vmem:[#allocation5 + $0x110] sm:$0xff]
    %v422 = vld [vmem:[#allocation5 + $0x118] sm:$0xff]
    %v423 = vld [vmem:[#allocation5 + $0x120] sm:$0xff]
    %v424 = vld [vmem:[#allocation5 + $0x128] sm:$0xff]
    %v425 = vld [vmem:[#allocation5 + $0x130] sm:$0xff]
    %v426 = vld [vmem:[#allocation5 + $0x138] sm:$0xff]
    %v427 = vld [vmem:[#allocation5 + $0x140] sm:$0xff]
    %v428 = vld [vmem:[#allocation5 + $0x148] sm:$0xff]
    %v429 = vld [vmem:[#allocation5 + $0x150] sm:$0xff]
    %v430 = vld [vmem:[#allocation5 + $0x158] sm:$0xff]
    %v431 = vld [vmem:[#allocation5 + $0x160] sm:$0xff]
    %v432 = vld [vmem:[#allocation5 + $0x168] sm:$0xff]
    %v433 = vld [vmem:[#allocation5 + $0x170] sm:$0xff]
    %v434 = vld [vmem:[#allocation5 + $0x178] sm:$0xff]
    %435 = vmatprep.subr.mxu0 %v388
    %436 = vmatpush1.msra.mxu0 %v387
    %437 = vmatprep.subr.mxu0 %v391
    %438 = vmatpush1.msra.mxu0 %v390
    %439 = vmatprep.subr.mxu0 %v394
    %440 = vmatpush1.msra.mxu0 %v393
    %441 = vmatprep.subr.mxu0 %v397
    %442 = vmatpush1.msra.mxu0 %v396
    %443 = vmatprep.subr.mxu0 %v400
    %444 = vmatpush1.msra.mxu0 %v399
    %445 = vmatprep.subr.mxu0 %v403
    %446 = vmatpush1.msra.mxu0 %v402
    %447 = vmatprep.subr.mxu0 %v406
    %448 = vmatpush1.msra.mxu0 %v405
    %449 = vmatprep.subr.mxu0 %v409
    %450 = vmatpush1.msra.mxu0 %v408
    %451 = vmatprep.subr.mxu0 %v412
    %452 = vmatpush1.msra.mxu0 %v411
    %453 = vmatprep.subr.mxu0 %v415
    %454 = vmatpush1.msra.mxu0 %v414
    %455 = vmatprep.subr.mxu0 %v418
    %456 = vmatpush1.msra.mxu0 %v417
    %457 = vmatprep.subr.mxu0 %v421
    %458 = vmatpush1.msra.mxu0 %v420
    %459 = vmatprep.subr.mxu0 %v424
    %460 = vmatpush1.msra.mxu0 %v423
    %461 = vmatprep.subr.mxu0 %v427
    %462 = vmatpush1.msra.mxu0 %v426
    %463 = vmatprep.subr.mxu0 %v430
    %464 = vmatpush1.msra.mxu0 %v429
    %465 = vmatprep.subr.mxu0 %v433
    %466 = vmatpush1.msra.mxu0 %v432
    %467 = vmatprep.subr.mxu0 0.0
    %468 = vmatpush1.msra.mxu0 0.0
    %469 = vmatprep.subr.mxu0 0.0
    %470 = vmatpush1.msra.mxu0 0.0
    %471 = vmatprep.subr.mxu0 0.0
    %472 = vmatpush1.msra.mxu0 0.0
    %473 = vmatprep.subr.mxu0 0.0
    %474 = vmatpush1.msra.mxu0 0.0
    %475 = vmatprep.subr.mxu0 0.0
    %476 = vmatpush1.msra.mxu0 0.0
    %477 = vmatprep.subr.mxu0 0.0
    %478 = vmatpush1.msra.mxu0 0.0
    %479 = vmatprep.subr.mxu0 0.0
    %480 = vmatpush1.msra.mxu0 0.0
    %481 = vmatprep.subr.mxu0 0.0
    %482 = vmatpush1.msra.mxu0 0.0
    %483 = vmatprep.subr.mxu0 0.0
    %484 = vmatpush1.msra.mxu0 0.0
    %485 = vmatprep.subr.mxu0 0.0
    %486 = vmatpush1.msra.mxu0 0.0
    %487 = vmatprep.subr.mxu0 0.0
    %488 = vmatpush1.msra.mxu0 0.0
    %489 = vmatprep.subr.mxu0 0.0
    %490 = vmatpush1.msra.mxu0 0.0
    %491 = vmatprep.subr.mxu0 0.0
    %492 = vmatpush1.msra.mxu0 0.0
    %493 = vmatprep.subr.mxu0 0.0
    %494 = vmatpush1.msra.mxu0 0.0
    %495 = vmatprep.subr.mxu0 0.0
    %496 = vmatpush1.msra.mxu0 0.0
    %497 = vmatprep.subr.mxu0 0.0
    %498 = vmatpush1.msra.mxu0 0.0
    %499 = vmatprep.mubr.f32.mxu0 0.0
    %500 = vmatmul.mubr.f32.gmra.mrb[0].mxu0 %v386
    %v501 = vpop.f32.mrb[0].mxu0
    %v502 = vadd.f32 0.0, %v501
    %v503 = vpop.f32.mrb[0].mxu0
    %v504 = vadd.f32 0.0, %v503
    %505 = vdwg.mxu0
    %506 = vmatprep.subr.mxu0 0.0
    %507 = vmatpush1.msra.mxu0 %v389
    %508 = vmatprep.subr.mxu0 0.0
    %509 = vmatpush1.msra.mxu0 %v392
    %510 = vmatprep.subr.mxu0 0.0
    %511 = vmatpush1.msra.mxu0 %v395
    %512 = vmatprep.subr.mxu0 0.0
    %513 = vmatpush1.msra.mxu0 %v398
    %514 = vmatprep.subr.mxu0 0.0
    %515 = vmatpush1.msra.mxu0 %v401
    %516 = vmatprep.subr.mxu0 0.0
    %517 = vmatpush1.msra.mxu0 %v404
    %518 = vmatprep.subr.mxu0 0.0
    %519 = vmatpush1.msra.mxu0 %v407
    %520 = vmatprep.subr.mxu0 0.0
    %521 = vmatpush1.msra.mxu0 %v410
    %522 = vmatprep.subr.mxu0 0.0
    %523 = vmatpush1.msra.mxu0 %v413
    %524 = vmatprep.subr.mxu0 0.0
    %525 = vmatpush1.msra.mxu0 %v416
    %526 = vmatprep.subr.mxu0 0.0
    %527 = vmatpush1.msra.mxu0 %v419
    %528 = vmatprep.subr.mxu0 0.0
    %529 = vmatpush1.msra.mxu0 %v422
    %530 = vmatprep.subr.mxu0 0.0
    %531 = vmatpush1.msra.mxu0 %v425
    %532 = vmatprep.subr.mxu0 0.0
    %533 = vmatpush1.msra.mxu0 %v428
    %534 = vmatprep.subr.mxu0 0.0
    %535 = vmatpush1.msra.mxu0 %v431
    %536 = vmatprep.subr.mxu0 0.0
    %537 = vmatpush1.msra.mxu0 %v434
    %538 = vmatprep.subr.mxu0 0.0
    %539 = vmatpush1.msra.mxu0 0.0
    %540 = vmatprep.subr.mxu0 0.0
    %541 = vmatpush1.msra.mxu0 0.0
    %542 = vmatprep.subr.mxu0 0.0
    %543 = vmatpush1.msra.mxu0 0.0
    %544 = vmatprep.subr.mxu0 0.0
    %545 = vmatpush1.msra.mxu0 0.0
    %546 = vmatprep.subr.mxu0 0.0
    %547 = vmatpush1.msra.mxu0 0.0
    %548 = vmatprep.subr.mxu0 0.0
    %549 = vmatpush1.msra.mxu0 0.0
    %550 = vmatprep.subr.mxu0 0.0
    %551 = vmatpush1.msra.mxu0 0.0
    %552 = vmatprep.subr.mxu0 0.0
    %553 = vmatpush1.msra.mxu0 0.0
    %554 = vmatprep.subr.mxu0 0.0
    %555 = vmatpush1.msra.mxu0 0.0
    %556 = vmatprep.subr.mxu0 0.0
    %557 = vmatpush1.msra.mxu0 0.0
    %558 = vmatprep.subr.mxu0 0.0
    %559 = vmatpush1.msra.mxu0 0.0
    %560 = vmatprep.subr.mxu0 0.0
    %561 = vmatpush1.msra.mxu0 0.0
    %562 = vmatprep.subr.mxu0 0.0
    %563 = vmatpush1.msra.mxu0 0.0
    %564 = vmatprep.subr.mxu0 0.0
    %565 = vmatpush1.msra.mxu0 0.0
    %566 = vmatprep.subr.mxu0 0.0
    %567 = vmatpush1.msra.mxu0 0.0
    %568 = vmatprep.subr.mxu0 0.0
    %569 = vmatpush1.msra.mxu0 0.0
    %570 = vmatprep.mubr.f32.mxu0 0.0
    %571 = vmatmul.mubr.f32.gmra.mrb[0].mxu0 %v386
    %v572 = vpop.f32.mrb[0].mxu0
    %v573 = vadd.f32 0.0, %v572
    %v574 = vpop.f32.mrb[0].mxu0
    %575 = vdwg.mxu0
    %v576 = vadd.f32 %v228, %v502
    %v577 = vxor.u32 %v576, 2147483648
    %v578 = vmul.f32 %v577, 1.442695
    %v579 = vpow.pop %v578
    %v580 = vadd.f32 %v579, 1.0
    %v581 = vrcp.pop %v580
    %v582 = vmul.f32 1.0, %v581
    %v583 = vadd.f32 %v230, %v504
    %v584 = vxor.u32 %v583, 2147483648
    %v585 = vmul.f32 %v584, 1.442695
    %v586 = vpow.pop %v585
    %v587 = vadd.f32 %v586, 1.0
    %v588 = vrcp.pop %v587
    %v589 = vmul.f32 1.0, %v588
    %v590 = vadd.f32 %v573, %v384
    %v591 = vmul.f32 %v590, %v582
    %v592 = vadd.f32 %v341, %v591
    %v593 = vtanh.pop %v592
    %v594 = vsub.f32 %v386, %v593
    %v595 = vmul.f32 %v589, %v594
    %v596 = vadd.f32 %v593, %v595
    %597 = vmatprep.subr.mxu0 %v388
    %598 = vmatpush1.msra.mxu0 %v387
    %599 = vmatprep.subr.mxu0 %v391
    %600 = vmatpush1.msra.mxu0 %v390
    %601 = vmatprep.subr.mxu0 %v394
    %602 = vmatpush1.msra.mxu0 %v393
    %603 = vmatprep.subr.mxu0 %v397
    %604 = vmatpush1.msra.mxu0 %v396
    %605 = vmatprep.subr.mxu0 %v400
    %606 = vmatpush1.msra.mxu0 %v399
    %607 = vmatprep.subr.mxu0 %v403
    %608 = vmatpush1.msra.mxu0 %v402
    %609 = vmatprep.subr.mxu0 %v406
    %610 = vmatpush1.msra.mxu0 %v405
    %611 = vmatprep.subr.mxu0 %v409
    %612 = vmatpush1.msra.mxu0 %v408
    %613 = vmatprep.subr.mxu0 %v412
    %614 = vmatpush1.msra.mxu0 %v411
    %615 = vmatprep.subr.mxu0 %v415
    %616 = vmatpush1.msra.mxu0 %v414
    %617 = vmatprep.subr.mxu0 %v418
    %618 = vmatpush1.msra.mxu0 %v417
    %619 = vmatprep.subr.mxu0 %v421
    %620 = vmatpush1.msra.mxu0 %v420
    %621 = vmatprep.subr.mxu0 %v424
    %622 = vmatpush1.msra.mxu0 %v423
    %623 = vmatprep.subr.mxu0 %v427
    %624 = vmatpush1.msra.mxu0 %v426
    %625 = vmatprep.subr.mxu0 %v430
    %626 = vmatpush1.msra.mxu0 %v429
    %627 = vmatprep.subr.mxu0 %v433
    %628 = vmatpush1.msra.mxu0 %v432
    %629 = vmatprep.subr.mxu0 0.0
    %630 = vmatpush1.msra.mxu0 0.0
    %631 = vmatprep.subr.mxu0 0.0
    %632 = vmatpush1.msra.mxu0 0.0
    %633 = vmatprep.subr.mxu0 0.0
    %634 = vmatpush1.msra.mxu0 0.0
    %635 = vmatprep.subr.mxu0 0.0
    %636 = vmatpush1.msra.mxu0 0.0
    %637 = vmatprep.subr.mxu0 0.0
    %638 = vmatpush1.msra.mxu0 0.0
    %639 = vmatprep.subr.mxu0 0.0
    %640 = vmatpush1.msra.mxu0 0.0
    %641 = vmatprep.subr.mxu0 0.0
    %642 = vmatpush1.msra.mxu0 0.0
    %643 = vmatprep.subr.mxu0 0.0
    %644 = vmatpush1.msra.mxu0 0.0
    %645 = vmatprep.subr.mxu0 0.0
    %646 = vmatpush1.msra.mxu0 0.0
    %647 = vmatprep.subr.mxu0 0.0
    %648 = vmatpush1.msra.mxu0 0.0
    %649 = vmatprep.subr.mxu0 0.0
    %650 = vmatpush1.msra.mxu0 0.0
    %651 = vmatprep.subr.mxu0 0.0
    %652 = vmatpush1.msra.mxu0 0.0
    %653 = vmatprep.subr.mxu0 0.0
    %654 = vmatpush1.msra.mxu0 0.0
    %655 = vmatprep.subr.mxu0 0.0
    %656 = vmatpush1.msra.mxu0 0.0
    %657 = vmatprep.subr.mxu0 0.0
    %658 = vmatpush1.msra.mxu0 0.0
    %659 = vmatprep.subr.mxu0 0.0
    %660 = vmatpush1.msra.mxu0 0.0
    %661 = vmatprep.mubr.f32.mxu0 0.0
    %662 = vmatmul.mubr.f32.gmra.mrb[0].mxu0 %v596
    %v663 = vpop.f32.mrb[0].mxu0
    %v664 = vadd.f32 0.0, %v663
    %v665 = vpop.f32.mrb[0].mxu0
    %v666 = vadd.f32 0.0, %v665
    %667 = vdwg.mxu0
    %668 = vmatprep.subr.mxu0 0.0
    %669 = vmatpush1.msra.mxu0 %v389
    %670 = vmatprep.subr.mxu0 0.0
    %671 = vmatpush1.msra.mxu0 %v392
    %672 = vmatprep.subr.mxu0 0.0
    %673 = vmatpush1.msra.mxu0 %v395
    %674 = vmatprep.subr.mxu0 0.0
    %675 = vmatpush1.msra.mxu0 %v398
    %676 = vmatprep.subr.mxu0 0.0
    %677 = vmatpush1.msra.mxu0 %v401
    %678 = vmatprep.subr.mxu0 0.0
    %679 = vmatpush1.msra.mxu0 %v404
    %680 = vmatprep.subr.mxu0 0.0
    %681 = vmatpush1.msra.mxu0 %v407
    %682 = vmatprep.subr.mxu0 0.0
    %683 = vmatpush1.msra.mxu0 %v410
    %684 = vmatprep.subr.mxu0 0.0
    %685 = vmatpush1.msra.mxu0 %v413
    %686 = vmatprep.subr.mxu0 0.0
    %687 = vmatpush1.msra.mxu0 %v416
    %688 = vmatprep.subr.mxu0 0.0
    %689 = vmatpush1.msra.mxu0 %v419
    %690 = vmatprep.subr.mxu0 0.0
    %691 = vmatpush1.msra.mxu0 %v422
    %692 = vmatprep.subr.mxu0 0.0
    %693 = vmatpush1.msra.mxu0 %v425
    %694 = vmatprep.subr.mxu0 0.0
    %695 = vmatpush1.msra.mxu0 %v428
    %696 = vmatprep.subr.mxu0 0.0
    %697 = vmatpush1.msra.mxu0 %v431
    %698 = vmatprep.subr.mxu0 0.0
    %699 = vmatpush1.msra.mxu0 %v434
    %700 = vmatprep.subr.mxu0 0.0
    %701 = vmatpush1.msra.mxu0 0.0
    %702 = vmatprep.subr.mxu0 0.0
    %703 = vmatpush1.msra.mxu0 0.0
    %704 = vmatprep.subr.mxu0 0.0
    %705 = vmatpush1.msra.mxu0 0.0
    %706 = vmatprep.subr.mxu0 0.0
    %707 = vmatpush1.msra.mxu0 0.0
    %708 = vmatprep.subr.mxu0 0.0
    %709 = vmatpush1.msra.mxu0 0.0
    %710 = vmatprep.subr.mxu0 0.0
    %711 = vmatpush1.msra.mxu0 0.0
    %712 = vmatprep.subr.mxu0 0.0
    %713 = vmatpush1.msra.mxu0 0.0
    %714 = vmatprep.subr.mxu0 0.0
    %715 = vmatpush1.msra.mxu0 0.0
    %716 = vmatprep.subr.mxu0 0.0
    %717 = vmatpush1.msra.mxu0 0.0
    %718 = vmatprep.subr.mxu0 0.0
    %719 = vmatpush1.msra.mxu0 0.0
    %720 = vmatprep.subr.mxu0 0.0
    %721 = vmatpush1.msra.mxu0 0.0
    %722 = vmatprep.subr.mxu0 0.0
    %723 = vmatpush1.msra.mxu0 0.0
    %724 = vmatprep.subr.mxu0 0.0
    %725 = vmatpush1.msra.mxu0 0.0
    %726 = vmatprep.subr.mxu0 0.0
    %727 = vmatpush1.msra.mxu0 0.0
    %728 = vmatprep.subr.mxu0 0.0
    %729 = vmatpush1.msra.mxu0 0.0
    %730 = vmatprep.subr.mxu0 0.0
    %731 = vmatpush1.msra.mxu0 0.0
    %732 = vmatprep.mubr.f32.mxu0 0.0
    %733 = vmatmul.mubr.f32.gmra.mrb[0].mxu0 %v596
    %v734 = vpop.f32.mrb[0].mxu0
    %v735 = vadd.f32 0.0, %v734
    %v736 = vpop.f32.mrb[0].mxu0
    %737 = vdwg.mxu0
    %v738 = vadd.f32 %v234, %v664
    %v739 = vxor.u32 %v738, 2147483648
    %v740 = vmul.f32 %v739, 1.442695
    %v741 = vpow.pop %v740
    %v742 = vadd.f32 %v741, 1.0
    %v743 = vrcp.pop %v742
    %v744 = vmul.f32 1.0, %v743
    %v745 = vadd.f32 %v236, %v666
    %v746 = vxor.u32 %v745, 2147483648
    %v747 = vmul.f32 %v746, 1.442695
    %v748 = vpow.pop %v747
    %v749 = vadd.f32 %v748, 1.0
    %v750 = vrcp.pop %v749
    %v751 = vmul.f32 1.0, %v750
    %v752 = vadd.f32 %v735, %v384
    %v753 = vmul.f32 %v752, %v744
    %v754 = vadd.f32 %v346, %v753
    %v755 = vtanh.pop %v754
    %v756 = vsub.f32 %v596, %v755
    %v757 = vmul.f32 %v751, %v756
    %v758 = vadd.f32 %v755, %v757
    %759 = vmatprep.subr.mxu0 %v388
    %760 = vmatpush1.msra.mxu0 %v387
    %761 = vmatprep.subr.mxu0 %v391
    %762 = vmatpush1.msra.mxu0 %v390
    %763 = vmatprep.subr.mxu0 %v394
    %764 = vmatpush1.msra.mxu0 %v393
    %765 = vmatprep.subr.mxu0 %v397
    %766 = vmatpush1.msra.mxu0 %v396
    %767 = vmatprep.subr.mxu0 %v400
    %768 = vmatpush1.msra.mxu0 %v399
    %769 = vmatprep.subr.mxu0 %v403
    %770 = vmatpush1.msra.mxu0 %v402
    %771 = vmatprep.subr.mxu0 %v406
    %772 = vmatpush1.msra.mxu0 %v405
    %773 = vmatprep.subr.mxu0 %v409
    %774 = vmatpush1.msra.mxu0 %v408
    %775 = vmatprep.subr.mxu0 %v412
    %776 = vmatpush1.msra.mxu0 %v411
    %777 = vmatprep.subr.mxu0 %v415
    %778 = vmatpush1.msra.mxu0 %v414
    %779 = vmatprep.subr.mxu0 %v418
    %780 = vmatpush1.msra.mxu0 %v417
    %781 = vmatprep.subr.mxu0 %v421
    %782 = vmatpush1.msra.mxu0 %v420
    %783 = vmatprep.subr.mxu0 %v424
    %784 = vmatpush1.msra.mxu0 %v423
    %785 = vmatprep.subr.mxu0 %v427
    %786 = vmatpush1.msra.mxu0 %v426
    %787 = vmatprep.subr.mxu0 %v430
    %788 = vmatpush1.msra.mxu0 %v429
    %789 = vmatprep.subr.mxu0 %v433
    %790 = vmatpush1.msra.mxu0 %v432
    %791 = vmatprep.subr.mxu0 0.0
    %792 = vmatpush1.msra.mxu0 0.0
    %793 = vmatprep.subr.mxu0 0.0
    %794 = vmatpush1.msra.mxu0 0.0
    %795 = vmatprep.subr.mxu0 0.0
    %796 = vmatpush1.msra.mxu0 0.0
    %797 = vmatprep.subr.mxu0 0.0
    %798 = vmatpush1.msra.mxu0 0.0
    %799 = vmatprep.subr.mxu0 0.0
    %800 = vmatpush1.msra.mxu0 0.0
    %801 = vmatprep.subr.mxu0 0.0
    %802 = vmatpush1.msra.mxu0 0.0
    %803 = vmatprep.subr.mxu0 0.0
    %804 = vmatpush1.msra.mxu0 0.0
    %805 = vmatprep.subr.mxu0 0.0
    %806 = vmatpush1.msra.mxu0 0.0
    %807 = vmatprep.subr.mxu0 0.0
    %808 = vmatpush1.msra.mxu0 0.0
    %809 = vmatprep.subr.mxu0 0.0
    %810 = vmatpush1.msra.mxu0 0.0
    %811 = vmatprep.subr.mxu0 0.0
    %812 = vmatpush1.msra.mxu0 0.0
    %813 = vmatprep.subr.mxu0 0.0
    %814 = vmatpush1.msra.mxu0 0.0
    %815 = vmatprep.subr.mxu0 0.0
    %816 = vmatpush1.msra.mxu0 0.0
    %817 = vmatprep.subr.mxu0 0.0
    %818 = vmatpush1.msra.mxu0 0.0
    %819 = vmatprep.subr.mxu0 0.0
    %820 = vmatpush1.msra.mxu0 0.0
    %821 = vmatprep.subr.mxu0 0.0
    %822 = vmatpush1.msra.mxu0 0.0
    %823 = vmatprep.mubr.f32.mxu0 0.0
    %824 = vmatmul.mubr.f32.gmra.mrb[0].mxu0 %v758
    %v825 = vpop.f32.mrb[0].mxu0
    %v826 = vadd.f32 0.0, %v825
    %v827 = vpop.f32.mrb[0].mxu0
    %v828 = vadd.f32 0.0, %v827
    %829 = vdwg.mxu0
    %830 = vmatprep.subr.mxu0 0.0
    %831 = vmatpush1.msra.mxu0 %v389
    %832 = vmatprep.subr.mxu0 0.0
    %833 = vmatpush1.msra.mxu0 %v392
    %834 = vmatprep.subr.mxu0 0.0
    %835 = vmatpush1.msra.mxu0 %v395
    %836 = vmatprep.subr.mxu0 0.0
    %837 = vmatpush1.msra.mxu0 %v398
    %838 = vmatprep.subr.mxu0 0.0
    %839 = vmatpush1.msra.mxu0 %v401
    %840 = vmatprep.subr.mxu0 0.0
    %841 = vmatpush1.msra.mxu0 %v404
    %842 = vmatprep.subr.mxu0 0.0
    %843 = vmatpush1.msra.mxu0 %v407
    %844 = vmatprep.subr.mxu0 0.0
    %845 = vmatpush1.msra.mxu0 %v410
    %846 = vmatprep.subr.mxu0 0.0
    %847 = vmatpush1.msra.mxu0 %v413
    %848 = vmatprep.subr.mxu0 0.0
    %849 = vmatpush1.msra.mxu0 %v416
    %850 = vmatprep.subr.mxu0 0.0
    %851 = vmatpush1.msra.mxu0 %v419
    %852 = vmatprep.subr.mxu0 0.0
    %853 = vmatpush1.msra.mxu0 %v422
    %854 = vmatprep.subr.mxu0 0.0
    %855 = vmatpush1.msra.mxu0 %v425
    %856 = vmatprep.subr.mxu0 0.0
    %857 = vmatpush1.msra.mxu0 %v428
    %858 = vmatprep.subr.mxu0 0.0
    %859 = vmatpush1.msra.mxu0 %v431
    %860 = vmatprep.subr.mxu0 0.0
    %861 = vmatpush1.msra.mxu0 %v434
    %862 = vmatprep.subr.mxu0 0.0
    %863 = vmatpush1.msra.mxu0 0.0
    %864 = vmatprep.subr.mxu0 0.0
    %865 = vmatpush1.msra.mxu0 0.0
    %866 = vmatprep.subr.mxu0 0.0
    %867 = vmatpush1.msra.mxu0 0.0
    %868 = vmatprep.subr.mxu0 0.0
    %869 = vmatpush1.msra.mxu0 0.0
    %870 = vmatprep.subr.mxu0 0.0
    %871 = vmatpush1.msra.mxu0 0.0
    %872 = vmatprep.subr.mxu0 0.0
    %873 = vmatpush1.msra.mxu0 0.0
    %874 = vmatprep.subr.mxu0 0.0
    %875 = vmatpush1.msra.mxu0 0.0
    %876 = vmatprep.subr.mxu0 0.0
    %877 = vmatpush1.msra.mxu0 0.0
    %878 = vmatprep.subr.mxu0 0.0
    %879 = vmatpush1.msra.mxu0 0.0
    %880 = vmatprep.subr.mxu0 0.0
    %881 = vmatpush1.msra.mxu0 0.0
    %882 = vmatprep.subr.mxu0 0.0
    %883 = vmatpush1.msra.mxu0 0.0
    %884 = vmatprep.subr.mxu0 0.0
    %885 = vmatpush1.msra.mxu0 0.0
    %886 = vmatprep.subr.mxu0 0.0
    %887 = vmatpush1.msra.mxu0 0.0
    %888 = vmatprep.subr.mxu0 0.0
    %889 = vmatpush1.msra.mxu0 0.0
    %890 = vmatprep.subr.mxu0 0.0
    %891 = vmatpush1.msra.mxu0 0.0
    %892 = vmatprep.subr.mxu0 0.0
    %893 = vmatpush1.msra.mxu0 0.0
    %894 = vmatprep.mubr.f32.mxu0 0.0
    %895 = vmatmul.mubr.f32.gmra.mrb[0].mxu0 %v758
    %v896 = vpop.f32.mrb[0].mxu0
    %v897 = vadd.f32 0.0, %v896
    %v898 = vpop.f32.mrb[0].mxu0
    %899 = vdwg.mxu0
    %v900 = vadd.f32 %v240, %v826
    %v901 = vxor.u32 %v900, 2147483648
    %v902 = vmul.f32 %v901, 1.442695
    %v903 = vpow.pop %v902
    %v904 = vadd.f32 %v903, 1.0
    %v905 = vrcp.pop %v904
    %v906 = vmul.f32 1.0, %v905
    %v907 = vadd.f32 %v242, %v828
    %v908 = vxor.u32 %v907, 2147483648
    %v909 = vmul.f32 %v908, 1.442695
    %v910 = vpow.pop %v909
    %v911 = vadd.f32 %v910, 1.0
    %v912 = vrcp.pop %v911
    %v913 = vmul.f32 1.0, %v912
    %v914 = vadd.f32 %v897, %v384
    %v915 = vmul.f32 %v914, %v906
    %v916 = vadd.f32 %v351, %v915
    %v917 = vtanh.pop %v916
    %v918 = vsub.f32 %v758, %v917
    %v919 = vmul.f32 %v913, %v918
    %v920 = vadd.f32 %v917, %v919
    %921 = vmatprep.subr.mxu0 %v388
    %922 = vmatpush1.msra.mxu0 %v387
    %923 = vmatprep.subr.mxu0 %v391
    %924 = vmatpush1.msra.mxu0 %v390
    %925 = vmatprep.subr.mxu0 %v394
    %926 = vmatpush1.msra.mxu0 %v393
    %927 = vmatprep.subr.mxu0 %v397
    %928 = vmatpush1.msra.mxu0 %v396
    %929 = vmatprep.subr.mxu0 %v400
    %930 = vmatpush1.msra.mxu0 %v399
    %931 = vmatprep.subr.mxu0 %v403
    %932 = vmatpush1.msra.mxu0 %v402
    %933 = vmatprep.subr.mxu0 %v406
    %934 = vmatpush1.msra.mxu0 %v405
    %935 = vmatprep.subr.mxu0 %v409
    %936 = vmatpush1.msra.mxu0 %v408
    %937 = vmatprep.subr.mxu0 %v412
    %938 = vmatpush1.msra.mxu0 %v411
    %939 = vmatprep.subr.mxu0 %v415
    %940 = vmatpush1.msra.mxu0 %v414
    %941 = vmatprep.subr.mxu0 %v418
    %942 = vmatpush1.msra.mxu0 %v417
    %943 = vmatprep.subr.mxu0 %v421
    %944 = vmatpush1.msra.mxu0 %v420
    %945 = vmatprep.subr.mxu0 %v424
    %946 = vmatpush1.msra.mxu0 %v423
    %947 = vmatprep.subr.mxu0 %v427
    %948 = vmatpush1.msra.mxu0 %v426
    %949 = vmatprep.subr.mxu0 %v430
    %950 = vmatpush1.msra.mxu0 %v429
    %951 = vmatprep.subr.mxu0 %v433
    %952 = vmatpush1.msra.mxu0 %v432
    %953 = vmatprep.subr.mxu0 0.0
    %954 = vmatpush1.msra.mxu0 0.0
    %955 = vmatprep.subr.mxu0 0.0
    %956 = vmatpush1.msra.mxu0 0.0
    %957 = vmatprep.subr.mxu0 0.0
    %958 = vmatpush1.msra.mxu0 0.0
    %959 = vmatprep.subr.mxu0 0.0
    %960 = vmatpush1.msra.mxu0 0.0
    %961 = vmatprep.subr.mxu0 0.0
    %962 = vmatpush1.msra.mxu0 0.0
    %963 = vmatprep.subr.mxu0 0.0
    %964 = vmatpush1.msra.mxu0 0.0
    %965 = vmatprep.subr.mxu0 0.0
    %966 = vmatpush1.msra.mxu0 0.0
    %967 = vmatprep.subr.mxu0 0.0
    %968 = vmatpush1.msra.mxu0 0.0
    %969 = vmatprep.subr.mxu0 0.0
    %970 = vmatpush1.msra.mxu0 0.0
    %971 = vmatprep.subr.mxu0 0.0
    %972 = vmatpush1.msra.mxu0 0.0
    %973 = vmatprep.subr.mxu0 0.0
    %974 = vmatpush1.msra.mxu0 0.0
    %975 = vmatprep.subr.mxu0 0.0
    %976 = vmatpush1.msra.mxu0 0.0
    %977 = vmatprep.subr.mxu0 0.0
    %978 = vmatpush1.msra.mxu0 0.0
    %979 = vmatprep.subr.mxu0 0.0
    %980 = vmatpush1.msra.mxu0 0.0
    %981 = vmatprep.subr.mxu0 0.0
    %982 = vmatpush1.msra.mxu0 0.0
    %983 = vmatprep.subr.mxu0 0.0
    %984 = vmatpush1.msra.mxu0 0.0
    %985 = vmatprep.mubr.f32.mxu0 0.0
    %986 = vmatmul.mubr.f32.gmra.mrb[0].mxu0 %v920
    %v987 = vpop.f32.mrb[0].mxu0
    %v988 = vadd.f32 0.0, %v987
    %v989 = vpop.f32.mrb[0].mxu0
    %v990 = vadd.f32 0.0, %v989
    %991 = vdwg.mxu0
    %992 = vmatprep.subr.mxu0 0.0
    %993 = vmatpush1.msra.mxu0 %v389
    %994 = vmatprep.subr.mxu0 0.0
    %995 = vmatpush1.msra.mxu0 %v392
    %996 = vmatprep.subr.mxu0 0.0
    %997 = vmatpush1.msra.mxu0 %v395
    %998 = vmatprep.subr.mxu0 0.0
    %999 = vmatpush1.msra.mxu0 %v398
    %1000 = vmatprep.subr.mxu0 0.0
    %1001 = vmatpush1.msra.mxu0 %v401
    %1002 = vmatprep.subr.mxu0 0.0
    %1003 = vmatpush1.msra.mxu0 %v404
    %1004 = vmatprep.subr.mxu0 0.0
    %1005 = vmatpush1.msra.mxu0 %v407
    %1006 = vmatprep.subr.mxu0 0.0
    %1007 = vmatpush1.msra.mxu0 %v410
    %1008 = vmatprep.subr.mxu0 0.0
    %1009 = vmatpush1.msra.mxu0 %v413
    %1010 = vmatprep.subr.mxu0 0.0
    %1011 = vmatpush1.msra.mxu0 %v416
    %1012 = vmatprep.subr.mxu0 0.0
    %1013 = vmatpush1.msra.mxu0 %v419
    %1014 = vmatprep.subr.mxu0 0.0
    %1015 = vmatpush1.msra.mxu0 %v422
    %1016 = vmatprep.subr.mxu0 0.0
    %1017 = vmatpush1.msra.mxu0 %v425
    %1018 = vmatprep.subr.mxu0 0.0
    %1019 = vmatpush1.msra.mxu0 %v428
    %1020 = vmatprep.subr.mxu0 0.0
    %1021 = vmatpush1.msra.mxu0 %v431
    %1022 = vmatprep.subr.mxu0 0.0
    %1023 = vmatpush1.msra.mxu0 %v434
    %1024 = vmatprep.subr.mxu0 0.0
    %1025 = vmatpush1.msra.mxu0 0.0
    %1026 = vmatprep.subr.mxu0 0.0
    %1027 = vmatpush1.msra.mxu0 0.0
    %1028 = vmatprep.subr.mxu0 0.0
    %1029 = vmatpush1.msra.mxu0 0.0
    %1030 = vmatprep.subr.mxu0 0.0
    %1031 = vmatpush1.msra.mxu0 0.0
    %1032 = vmatprep.subr.mxu0 0.0
    %1033 = vmatpush1.msra.mxu0 0.0
    %1034 = vmatprep.subr.mxu0 0.0
    %1035 = vmatpush1.msra.mxu0 0.0
    %1036 = vmatprep.subr.mxu0 0.0
    %1037 = vmatpush1.msra.mxu0 0.0
    %1038 = vmatprep.subr.mxu0 0.0
    %1039 = vmatpush1.msra.mxu0 0.0
    %1040 = vmatprep.subr.mxu0 0.0
    %1041 = vmatpush1.msra.mxu0 0.0
    %1042 = vmatprep.subr.mxu0 0.0
    %1043 = vmatpush1.msra.mxu0 0.0
    %1044 = vmatprep.subr.mxu0 0.0
    %1045 = vmatpush1.msra.mxu0 0.0
    %1046 = vmatprep.subr.mxu0 0.0
    %1047 = vmatpush1.msra.mxu0 0.0
    %1048 = vmatprep.subr.mxu0 0.0
    %1049 = vmatpush1.msra.mxu0 0.0
    %1050 = vmatprep.subr.mxu0 0.0
    %1051 = vmatpush1.msra.mxu0 0.0
    %1052 = vmatprep.subr.mxu0 0.0
    %1053 = vmatpush1.msra.mxu0 0.0
    %1054 = vmatprep.subr.mxu0 0.0
    %1055 = vmatpush1.msra.mxu0 0.0
    %1056 = vmatprep.mubr.f32.mxu0 0.0
    %1057 = vmatmul.mubr.f32.gmra.mrb[0].mxu0 %v920
    %v1058 = vpop.f32.mrb[0].mxu0
    %v1059 = vadd.f32 0.0, %v1058
    %v1060 = vpop.f32.mrb[0].mxu0
    %1061 = vdwg.mxu0
    %v1062 = vadd.f32 %v246, %v988
    %v1063 = vxor.u32 %v1062, 2147483648
    %v1064 = vmul.f32 %v1063, 1.442695
    %v1065 = vpow.pop %v1064
    %v1066 = vadd.f32 %v1065, 1.0
    %v1067 = vrcp.pop %v1066
    %v1068 = vmul.f32 1.0, %v1067
    %v1069 = vadd.f32 %v248, %v990
    %v1070 = vxor.u32 %v1069, 2147483648
    %v1071 = vmul.f32 %v1070, 1.442695
    %v1072 = vpow.pop %v1071
    %v1073 = vadd.f32 %v1072, 1.0
    %v1074 = vrcp.pop %v1073
    %v1075 = vmul.f32 1.0, %v1074
    %v1076 = vadd.f32 %v1059, %v384
    %v1077 = vmul.f32 %v1076, %v1068
    %v1078 = vadd.f32 %v356, %v1077
    %v1079 = vtanh.pop %v1078
    %v1080 = vsub.f32 %v920, %v1079
    %v1081 = vmul.f32 %v1075, %v1080
    %v1082 = vadd.f32 %v1079, %v1081
    %1083 = vmatprep.subr.mxu0 %v388
    %1084 = vmatpush1.msra.mxu0 %v387
    %1085 = vmatprep.subr.mxu0 %v391
    %1086 = vmatpush1.msra.mxu0 %v390
    %1087 = vmatprep.subr.mxu0 %v394
    %1088 = vmatpush1.msra.mxu0 %v393
    %1089 = vmatprep.subr.mxu0 %v397
    %1090 = vmatpush1.msra.mxu0 %v396
    %1091 = vmatprep.subr.mxu0 %v400
    %1092 = vmatpush1.msra.mxu0 %v399
    %1093 = vmatprep.subr.mxu0 %v403
    %1094 = vmatpush1.msra.mxu0 %v402
    %1095 = vmatprep.subr.mxu0 %v406
    %1096 = vmatpush1.msra.mxu0 %v405
    %1097 = vmatprep.subr.mxu0 %v409
    %1098 = vmatpush1.msra.mxu0 %v408
    %1099 = vmatprep.subr.mxu0 %v412
    %1100 = vmatpush1.msra.mxu0 %v411
    %1101 = vmatprep.subr.mxu0 %v415
    %1102 = vmatpush1.msra.mxu0 %v414
    %1103 = vmatprep.subr.mxu0 %v418
    %1104 = vmatpush1.msra.mxu0 %v417
    %1105 = vmatprep.subr.mxu0 %v421
    %1106 = vmatpush1.msra.mxu0 %v420
    %1107 = vmatprep.subr.mxu0 %v424
    %1108 = vmatpush1.msra.mxu0 %v423
    %1109 = vmatprep.subr.mxu0 %v427
    %1110 = vmatpush1.msra.mxu0 %v426
    %1111 = vmatprep.subr.mxu0 %v430
    %1112 = vmatpush1.msra.mxu0 %v429
    %1113 = vmatprep.subr.mxu0 %v433
    %1114 = vmatpush1.msra.mxu0 %v432
    %1115 = vmatprep.subr.mxu0 0.0
    %1116 = vmatpush1.msra.mxu0 0.0
    %1117 = vmatprep.subr.mxu0 0.0
    %1118 = vmatpush1.msra.mxu0 0.0
    %1119 = vmatprep.subr.mxu0 0.0
    %1120 = vmatpush1.msra.mxu0 0.0
    %1121 = vmatprep.subr.mxu0 0.0
    %1122 = vmatpush1.msra.mxu0 0.0
    %1123 = vmatprep.subr.mxu0 0.0
    %1124 = vmatpush1.msra.mxu0 0.0
    %1125 = vmatprep.subr.mxu0 0.0
    %1126 = vmatpush1.msra.mxu0 0.0
    %1127 = vmatprep.subr.mxu0 0.0
    %1128 = vmatpush1.msra.mxu0 0.0
    %1129 = vmatprep.subr.mxu0 0.0
    %1130 = vmatpush1.msra.mxu0 0.0
    %1131 = vmatprep.subr.mxu0 0.0
    %1132 = vmatpush1.msra.mxu0 0.0
    %1133 = vmatprep.subr.mxu0 0.0
    %1134 = vmatpush1.msra.mxu0 0.0
    %1135 = vmatprep.subr.mxu0 0.0
    %1136 = vmatpush1.msra.mxu0 0.0
    %1137 = vmatprep.subr.mxu0 0.0
    %1138 = vmatpush1.msra.mxu0 0.0
    %1139 = vmatprep.subr.mxu0 0.0
    %1140 = vmatpush1.msra.mxu0 0.0
    %1141 = vmatprep.subr.mxu0 0.0
    %1142 = vmatpush1.msra.mxu0 0.0
    %1143 = vmatprep.subr.mxu0 0.0
    %1144 = vmatpush1.msra.mxu0 0.0
    %1145 = vmatprep.subr.mxu0 0.0
    %1146 = vmatpush1.msra.mxu0 0.0
    %1147 = vmatprep.mubr.f32.mxu0 0.0
    %1148 = vmatmul.mubr.f32.gmra.mrb[0].mxu0 %v1082
    %v1149 = vpop.f32.mrb[0].mxu0
    %v1150 = vadd.f32 0.0, %v1149
    %v1151 = vpop.f32.mrb[0].mxu0
    %v1152 = vadd.f32 0.0, %v1151
    %1153 = vdwg.mxu0
    %1154 = vmatprep.subr.mxu0 0.0
    %1155 = vmatpush1.msra.mxu0 %v389
    %1156 = vmatprep.subr.mxu0 0.0
    %1157 = vmatpush1.msra.mxu0 %v392
    %1158 = vmatprep.subr.mxu0 0.0
    %1159 = vmatpush1.msra.mxu0 %v395
    %1160 = vmatprep.subr.mxu0 0.0
    %1161 = vmatpush1.msra.mxu0 %v398
    %1162 = vmatprep.subr.mxu0 0.0
    %1163 = vmatpush1.msra.mxu0 %v401
    %1164 = vmatprep.subr.mxu0 0.0
    %1165 = vmatpush1.msra.mxu0 %v404
    %1166 = vmatprep.subr.mxu0 0.0
    %1167 = vmatpush1.msra.mxu0 %v407
    %1168 = vmatprep.subr.mxu0 0.0
    %1169 = vmatpush1.msra.mxu0 %v410
    %1170 = vmatprep.subr.mxu0 0.0
    %1171 = vmatpush1.msra.mxu0 %v413
    %1172 = vmatprep.subr.mxu0 0.0
    %1173 = vmatpush1.msra.mxu0 %v416
    %1174 = vmatprep.subr.mxu0 0.0
    %1175 = vmatpush1.msra.mxu0 %v419
    %1176 = vmatprep.subr.mxu0 0.0
    %1177 = vmatpush1.msra.mxu0 %v422
    %1178 = vmatprep.subr.mxu0 0.0
    %1179 = vmatpush1.msra.mxu0 %v425
    %1180 = vmatprep.subr.mxu0 0.0
    %1181 = vmatpush1.msra.mxu0 %v428
    %1182 = vmatprep.subr.mxu0 0.0
    %1183 = vmatpush1.msra.mxu0 %v431
    %1184 = vmatprep.subr.mxu0 0.0
    %1185 = vmatpush1.msra.mxu0 %v434
    %1186 = vmatprep.subr.mxu0 0.0
    %1187 = vmatpush1.msra.mxu0 0.0
    %1188 = vmatprep.subr.mxu0 0.0
    %1189 = vmatpush1.msra.mxu0 0.0
    %1190 = vmatprep.subr.mxu0 0.0
    %1191 = vmatpush1.msra.mxu0 0.0
    %1192 = vmatprep.subr.mxu0 0.0
    %1193 = vmatpush1.msra.mxu0 0.0
    %1194 = vmatprep.subr.mxu0 0.0
    %1195 = vmatpush1.msra.mxu0 0.0
    %1196 = vmatprep.subr.mxu0 0.0
    %1197 = vmatpush1.msra.mxu0 0.0
    %1198 = vmatprep.subr.mxu0 0.0
    %1199 = vmatpush1.msra.mxu0 0.0
    %1200 = vmatprep.subr.mxu0 0.0
    %1201 = vmatpush1.msra.mxu0 0.0
    %1202 = vmatprep.subr.mxu0 0.0
    %1203 = vmatpush1.msra.mxu0 0.0
    %1204 = vmatprep.subr.mxu0 0.0
    %1205 = vmatpush1.msra.mxu0 0.0
    %1206 = vmatprep.subr.mxu0 0.0
    %1207 = vmatpush1.msra.mxu0 0.0
    %1208 = vmatprep.subr.mxu0 0.0
    %1209 = vmatpush1.msra.mxu0 0.0
    %1210 = vmatprep.subr.mxu0 0.0
    %1211 = vmatpush1.msra.mxu0 0.0
    %1212 = vmatprep.subr.mxu0 0.0
    %1213 = vmatpush1.msra.mxu0 0.0
    %1214 = vmatprep.subr.mxu0 0.0
    %1215 = vmatpush1.msra.mxu0 0.0
    %1216 = vmatprep.subr.mxu0 0.0
    %1217 = vmatpush1.msra.mxu0 0.0
    %1218 = vmatprep.mubr.f32.mxu0 0.0
    %1219 = vmatmul.mubr.f32.gmra.mrb[0].mxu0 %v1082
    %v1220 = vpop.f32.mrb[0].mxu0
    %v1221 = vadd.f32 0.0, %v1220
    %v1222 = vpop.f32.mrb[0].mxu0
    %1223 = vdwg.mxu0
    %v1224 = vadd.f32 %v252, %v1150
    %v1225 = vxor.u32 %v1224, 2147483648
    %v1226 = vmul.f32 %v1225, 1.442695
    %v1227 = vpow.pop %v1226
    %v1228 = vadd.f32 %v1227, 1.0
    %v1229 = vrcp.pop %v1228
    %v1230 = vmul.f32 1.0, %v1229
    %v1231 = vadd.f32 %v254, %v1152
    %v1232 = vxor.u32 %v1231, 2147483648
    %v1233 = vmul.f32 %v1232, 1.442695
    %v1234 = vpow.pop %v1233
    %v1235 = vadd.f32 %v1234, 1.0
    %v1236 = vrcp.pop %v1235
    %v1237 = vmul.f32 1.0, %v1236
    %v1238 = vadd.f32 %v1221, %v384
    %v1239 = vmul.f32 %v1238, %v1230
    %v1240 = vadd.f32 %v361, %v1239
    %v1241 = vtanh.pop %v1240
    %v1242 = vsub.f32 %v1082, %v1241
    %v1243 = vmul.f32 %v1237, %v1242
    %v1244 = vadd.f32 %v1241, %v1243
    %1245 = vmatprep.subr.mxu0 %v388
    %1246 = vmatpush1.msra.mxu0 %v387
    %1247 = vmatprep.subr.mxu0 %v391
    %1248 = vmatpush1.msra.mxu0 %v390
    %1249 = vmatprep.subr.mxu0 %v394
    %1250 = vmatpush1.msra.mxu0 %v393
    %1251 = vmatprep.subr.mxu0 %v397
    %1252 = vmatpush1.msra.mxu0 %v396
    %1253 = vmatprep.subr.mxu0 %v400
    %1254 = vmatpush1.msra.mxu0 %v399
    %1255 = vmatprep.subr.mxu0 %v403
    %1256 = vmatpush1.msra.mxu0 %v402
    %1257 = vmatprep.subr.mxu0 %v406
    %1258 = vmatpush1.msra.mxu0 %v405
    %1259 = vmatprep.subr.mxu0 %v409
    %1260 = vmatpush1.msra.mxu0 %v408
    %1261 = vmatprep.subr.mxu0 %v412
    %1262 = vmatpush1.msra.mxu0 %v411
    %1263 = vmatprep.subr.mxu0 %v415
    %1264 = vmatpush1.msra.mxu0 %v414
    %1265 = vmatprep.subr.mxu0 %v418
    %1266 = vmatpush1.msra.mxu0 %v417
    %1267 = vmatprep.subr.mxu0 %v421
    %1268 = vmatpush1.msra.mxu0 %v420
    %1269 = vmatprep.subr.mxu0 %v424
    %1270 = vmatpush1.msra.mxu0 %v423
    %1271 = vmatprep.subr.mxu0 %v427
    %1272 = vmatpush1.msra.mxu0 %v426
    %1273 = vmatprep.subr.mxu0 %v430
    %1274 = vmatpush1.msra.mxu0 %v429
    %1275 = vmatprep.subr.mxu0 %v433
    %1276 = vmatpush1.msra.mxu0 %v432
    %1277 = vmatprep.subr.mxu0 0.0
    %1278 = vmatpush1.msra.mxu0 0.0
    %1279 = vmatprep.subr.mxu0 0.0
    %1280 = vmatpush1.msra.mxu0 0.0
    %1281 = vmatprep.subr.mxu0 0.0
    %1282 = vmatpush1.msra.mxu0 0.0
    %1283 = vmatprep.subr.mxu0 0.0
    %1284 = vmatpush1.msra.mxu0 0.0
    %1285 = vmatprep.subr.mxu0 0.0
    %1286 = vmatpush1.msra.mxu0 0.0
    %1287 = vmatprep.subr.mxu0 0.0
    %1288 = vmatpush1.msra.mxu0 0.0
    %1289 = vmatprep.subr.mxu0 0.0
    %1290 = vmatpush1.msra.mxu0 0.0
    %1291 = vmatprep.subr.mxu0 0.0
    %1292 = vmatpush1.msra.mxu0 0.0
    %1293 = vmatprep.subr.mxu0 0.0
    %1294 = vmatpush1.msra.mxu0 0.0
    %1295 = vmatprep.subr.mxu0 0.0
    %1296 = vmatpush1.msra.mxu0 0.0
    %1297 = vmatprep.subr.mxu0 0.0
    %1298 = vmatpush1.msra.mxu0 0.0
    %1299 = vmatprep.subr.mxu0 0.0
    %1300 = vmatpush1.msra.mxu0 0.0
    %1301 = vmatprep.subr.mxu0 0.0
    %1302 = vmatpush1.msra.mxu0 0.0
    %1303 = vmatprep.subr.mxu0 0.0
    %1304 = vmatpush1.msra.mxu0 0.0
    %1305 = vmatprep.subr.mxu0 0.0
    %1306 = vmatpush1.msra.mxu0 0.0
    %1307 = vmatprep.subr.mxu0 0.0
    %1308 = vmatpush1.msra.mxu0 0.0
    %1309 = vmatprep.mubr.f32.mxu0 0.0
    %1310 = vmatmul.mubr.f32.gmra.mrb[0].mxu0 %v1244
    %v1311 = vpop.f32.mrb[0].mxu0
    %v1312 = vadd.f32 0.0, %v1311
    %v1313 = vpop.f32.mrb[0].mxu0
    %v1314 = vadd.f32 0.0, %v1313
    %1315 = vdwg.mxu0
    %1316 = vmatprep.subr.mxu0 0.0
    %1317 = vmatpush1.msra.mxu0 %v389
    %1318 = vmatprep.subr.mxu0 0.0
    %1319 = vmatpush1.msra.mxu0 %v392
    %1320 = vmatprep.subr.mxu0 0.0
    %1321 = vmatpush1.msra.mxu0 %v395
    %1322 = vmatprep.subr.mxu0 0.0
    %1323 = vmatpush1.msra.mxu0 %v398
    %1324 = vmatprep.subr.mxu0 0.0
    %1325 = vmatpush1.msra.mxu0 %v401
    %1326 = vmatprep.subr.mxu0 0.0
    %1327 = vmatpush1.msra.mxu0 %v404
    %1328 = vmatprep.subr.mxu0 0.0
    %1329 = vmatpush1.msra.mxu0 %v407
    %1330 = vmatprep.subr.mxu0 0.0
    %1331 = vmatpush1.msra.mxu0 %v410
    %1332 = vmatprep.subr.mxu0 0.0
    %1333 = vmatpush1.msra.mxu0 %v413
    %1334 = vmatprep.subr.mxu0 0.0
    %1335 = vmatpush1.msra.mxu0 %v416
    %1336 = vmatprep.subr.mxu0 0.0
    %1337 = vmatpush1.msra.mxu0 %v419
    %1338 = vmatprep.subr.mxu0 0.0
    %1339 = vmatpush1.msra.mxu0 %v422
    %1340 = vmatprep.subr.mxu0 0.0
    %1341 = vmatpush1.msra.mxu0 %v425
    %1342 = vmatprep.subr.mxu0 0.0
    %1343 = vmatpush1.msra.mxu0 %v428
    %1344 = vmatprep.subr.mxu0 0.0
    %1345 = vmatpush1.msra.mxu0 %v431
    %1346 = vmatprep.subr.mxu0 0.0
    %1347 = vmatpush1.msra.mxu0 %v434
    %1348 = vmatprep.subr.mxu0 0.0
    %1349 = vmatpush1.msra.mxu0 0.0
    %1350 = vmatprep.subr.mxu0 0.0
    %1351 = vmatpush1.msra.mxu0 0.0
    %1352 = vmatprep.subr.mxu0 0.0
    %1353 = vmatpush1.msra.mxu0 0.0
    %1354 = vmatprep.subr.mxu0 0.0
    %1355 = vmatpush1.msra.mxu0 0.0
    %1356 = vmatprep.subr.mxu0 0.0
    %1357 = vmatpush1.msra.mxu0 0.0
    %1358 = vmatprep.subr.mxu0 0.0
    %1359 = vmatpush1.msra.mxu0 0.0
    %1360 = vmatprep.subr.mxu0 0.0
    %1361 = vmatpush1.msra.mxu0 0.0
    %1362 = vmatprep.subr.mxu0 0.0
    %1363 = vmatpush1.msra.mxu0 0.0
    %1364 = vmatprep.subr.mxu0 0.0
    %1365 = vmatpush1.msra.mxu0 0.0
    %1366 = vmatprep.subr.mxu0 0.0
    %1367 = vmatpush1.msra.mxu0 0.0
    %1368 = vmatprep.subr.mxu0 0.0
    %1369 = vmatpush1.msra.mxu0 0.0
    %1370 = vmatprep.subr.mxu0 0.0
    %1371 = vmatpush1.msra.mxu0 0.0
    %1372 = vmatprep.subr.mxu0 0.0
    %1373 = vmatpush1.msra.mxu0 0.0
    %1374 = vmatprep.subr.mxu0 0.0
    %1375 = vmatpush1.msra.mxu0 0.0
    %1376 = vmatprep.subr.mxu0 0.0
    %1377 = vmatpush1.msra.mxu0 0.0
    %1378 = vmatprep.subr.mxu0 0.0
    %1379 = vmatpush1.msra.mxu0 0.0
    %1380 = vmatprep.mubr.f32.mxu0 0.0
    %1381 = vmatmul.mubr.f32.gmra.mrb[0].mxu0 %v1244
    %v1382 = vpop.f32.mrb[0].mxu0
    %v1383 = vadd.f32 0.0, %v1382
    %v1384 = vpop.f32.mrb[0].mxu0
    %1385 = vdwg.mxu0
    %v1386 = vadd.f32 %v258, %v1312
    %v1387 = vxor.u32 %v1386, 2147483648
    %v1388 = vmul.f32 %v1387, 1.442695
    %v1389 = vpow.pop %v1388
    %v1390 = vadd.f32 %v1389, 1.0
    %v1391 = vrcp.pop %v1390
    %v1392 = vmul.f32 1.0, %v1391
    %v1393 = vadd.f32 %v260, %v1314
    %v1394 = vxor.u32 %v1393, 2147483648
    %v1395 = vmul.f32 %v1394, 1.442695
    %v1396 = vpow.pop %v1395
    %v1397 = vadd.f32 %v1396, 1.0
    %v1398 = vrcp.pop %v1397
    %v1399 = vmul.f32 1.0, %v1398
    %v1400 = vadd.f32 %v1383, %v384
    %v1401 = vmul.f32 %v1400, %v1392
    %v1402 = vadd.f32 %v366, %v1401
    %v1403 = vtanh.pop %v1402
    %v1404 = vsub.f32 %v1244, %v1403
    %v1405 = vmul.f32 %v1399, %v1404
    %v1406 = vadd.f32 %v1403, %v1405
    %1407 = vmatprep.subr.mxu0 %v388
    %1408 = vmatpush1.msra.mxu0 %v387
    %1409 = vmatprep.subr.mxu0 %v391
    %1410 = vmatpush1.msra.mxu0 %v390
    %1411 = vmatprep.subr.mxu0 %v394
    %1412 = vmatpush1.msra.mxu0 %v393
    %1413 = vmatprep.subr.mxu0 %v397
    %1414 = vmatpush1.msra.mxu0 %v396
    %1415 = vmatprep.subr.mxu0 %v400
    %1416 = vmatpush1.msra.mxu0 %v399
    %1417 = vmatprep.subr.mxu0 %v403
    %1418 = vmatpush1.msra.mxu0 %v402
    %1419 = vmatprep.subr.mxu0 %v406
    %1420 = vmatpush1.msra.mxu0 %v405
    %1421 = vmatprep.subr.mxu0 %v409
    %1422 = vmatpush1.msra.mxu0 %v408
    %1423 = vmatprep.subr.mxu0 %v412
    %1424 = vmatpush1.msra.mxu0 %v411
    %1425 = vmatprep.subr.mxu0 %v415
    %1426 = vmatpush1.msra.mxu0 %v414
    %1427 = vmatprep.subr.mxu0 %v418
    %1428 = vmatpush1.msra.mxu0 %v417
    %1429 = vmatprep.subr.mxu0 %v421
    %1430 = vmatpush1.msra.mxu0 %v420
    %1431 = vmatprep.subr.mxu0 %v424
    %1432 = vmatpush1.msra.mxu0 %v423
    %1433 = vmatprep.subr.mxu0 %v427
    %1434 = vmatpush1.msra.mxu0 %v426
    %1435 = vmatprep.subr.mxu0 %v430
    %1436 = vmatpush1.msra.mxu0 %v429
    %1437 = vmatprep.subr.mxu0 %v433
    %1438 = vmatpush1.msra.mxu0 %v432
    %1439 = vmatprep.subr.mxu0 0.0
    %1440 = vmatpush1.msra.mxu0 0.0
    %1441 = vmatprep.subr.mxu0 0.0
    %1442 = vmatpush1.msra.mxu0 0.0
    %1443 = vmatprep.subr.mxu0 0.0
    %1444 = vmatpush1.msra.mxu0 0.0
    %1445 = vmatprep.subr.mxu0 0.0
    %1446 = vmatpush1.msra.mxu0 0.0
    %1447 = vmatprep.subr.mxu0 0.0
    %1448 = vmatpush1.msra.mxu0 0.0
    %1449 = vmatprep.subr.mxu0 0.0
    %1450 = vmatpush1.msra.mxu0 0.0
    %1451 = vmatprep.subr.mxu0 0.0
    %1452 = vmatpush1.msra.mxu0 0.0
    %1453 = vmatprep.subr.mxu0 0.0
    %1454 = vmatpush1.msra.mxu0 0.0
    %1455 = vmatprep.subr.mxu0 0.0
    %1456 = vmatpush1.msra.mxu0 0.0
    %1457 = vmatprep.subr.mxu0 0.0
    %1458 = vmatpush1.msra.mxu0 0.0
    %1459 = vmatprep.subr.mxu0 0.0
    %1460 = vmatpush1.msra.mxu0 0.0
    %1461 = vmatprep.subr.mxu0 0.0
    %1462 = vmatpush1.msra.mxu0 0.0
    %1463 = vmatprep.subr.mxu0 0.0
    %1464 = vmatpush1.msra.mxu0 0.0
    %1465 = vmatprep.subr.mxu0 0.0
    %1466 = vmatpush1.msra.mxu0 0.0
    %1467 = vmatprep.subr.mxu0 0.0
    %1468 = vmatpush1.msra.mxu0 0.0
    %1469 = vmatprep.subr.mxu0 0.0
    %1470 = vmatpush1.msra.mxu0 0.0
    %1471 = vmatprep.mubr.f32.mxu0 0.0
    %1472 = vmatmul.mubr.f32.gmra.mrb[0].mxu0 %v1406
    %v1473 = vpop.f32.mrb[0].mxu0
    %v1474 = vadd.f32 0.0, %v1473
    %v1475 = vpop.f32.mrb[0].mxu0
    %v1476 = vadd.f32 0.0, %v1475
    %1477 = vdwg.mxu0
    %1478 = vmatprep.subr.mxu0 0.0
    %1479 = vmatpush1.msra.mxu0 %v389
    %1480 = vmatprep.subr.mxu0 0.0
    %1481 = vmatpush1.msra.mxu0 %v392
    %1482 = vmatprep.subr.mxu0 0.0
    %1483 = vmatpush1.msra.mxu0 %v395
    %1484 = vmatprep.subr.mxu0 0.0
    %1485 = vmatpush1.msra.mxu0 %v398
    %1486 = vmatprep.subr.mxu0 0.0
    %1487 = vmatpush1.msra.mxu0 %v401
    %1488 = vmatprep.subr.mxu0 0.0
    %1489 = vmatpush1.msra.mxu0 %v404
    %1490 = vmatprep.subr.mxu0 0.0
    %1491 = vmatpush1.msra.mxu0 %v407
    %1492 = vmatprep.subr.mxu0 0.0
    %1493 = vmatpush1.msra.mxu0 %v410
    %1494 = vmatprep.subr.mxu0 0.0
    %1495 = vmatpush1.msra.mxu0 %v413
    %1496 = vmatprep.subr.mxu0 0.0
    %1497 = vmatpush1.msra.mxu0 %v416
    %1498 = vmatprep.subr.mxu0 0.0
    %1499 = vmatpush1.msra.mxu0 %v419
    %1500 = vmatprep.subr.mxu0 0.0
    %1501 = vmatpush1.msra.mxu0 %v422
    %1502 = vmatprep.subr.mxu0 0.0
    %1503 = vmatpush1.msra.mxu0 %v425
    %1504 = vmatprep.subr.mxu0 0.0
    %1505 = vmatpush1.msra.mxu0 %v428
    %1506 = vmatprep.subr.mxu0 0.0
    %1507 = vmatpush1.msra.mxu0 %v431
    %1508 = vmatprep.subr.mxu0 0.0
    %1509 = vmatpush1.msra.mxu0 %v434
    %1510 = vmatprep.subr.mxu0 0.0
    %1511 = vmatpush1.msra.mxu0 0.0
    %1512 = vmatprep.subr.mxu0 0.0
    %1513 = vmatpush1.msra.mxu0 0.0
    %1514 = vmatprep.subr.mxu0 0.0
    %1515 = vmatpush1.msra.mxu0 0.0
    %1516 = vmatprep.subr.mxu0 0.0
    %1517 = vmatpush1.msra.mxu0 0.0
    %1518 = vmatprep.subr.mxu0 0.0
    %1519 = vmatpush1.msra.mxu0 0.0
    %1520 = vmatprep.subr.mxu0 0.0
    %1521 = vmatpush1.msra.mxu0 0.0
    %1522 = vmatprep.subr.mxu0 0.0
    %1523 = vmatpush1.msra.mxu0 0.0
    %1524 = vmatprep.subr.mxu0 0.0
    %1525 = vmatpush1.msra.mxu0 0.0
    %1526 = vmatprep.subr.mxu0 0.0
    %1527 = vmatpush1.msra.mxu0 0.0
    %1528 = vmatprep.subr.mxu0 0.0
    %1529 = vmatpush1.msra.mxu0 0.0
    %1530 = vmatprep.subr.mxu0 0.0
    %1531 = vmatpush1.msra.mxu0 0.0
    %1532 = vmatprep.subr.mxu0 0.0
    %1533 = vmatpush1.msra.mxu0 0.0
    %1534 = vmatprep.subr.mxu0 0.0
    %1535 = vmatpush1.msra.mxu0 0.0
    %1536 = vmatprep.subr.mxu0 0.0
    %1537 = vmatpush1.msra.mxu0 0.0
    %1538 = vmatprep.subr.mxu0 0.0
    %1539 = vmatpush1.msra.mxu0 0.0
    %1540 = vmatprep.subr.mxu0 0.0
    %1541 = vmatpush1.msra.mxu0 0.0
    %1542 = vmatprep.mubr.f32.mxu0 0.0
    %1543 = vmatmul.mubr.f32.gmra.mrb[0].mxu0 %v1406
    %v1544 = vpop.f32.mrb[0].mxu0
    %v1545 = vadd.f32 0.0, %v1544
    %v1546 = vpop.f32.mrb[0].mxu0
    %1547 = vdwg.mxu0
    %v1548 = vadd.f32 %v264, %v1474
    %v1549 = vxor.u32 %v1548, 2147483648
    %v1550 = vmul.f32 %v1549, 1.442695
    %v1551 = vpow.pop %v1550
    %v1552 = vadd.f32 %v1551, 1.0
    %v1553 = vrcp.pop %v1552
    %v1554 = vmul.f32 1.0, %v1553
    %v1555 = vadd.f32 %v266, %v1476
    %v1556 = vxor.u32 %v1555, 2147483648
    %v1557 = vmul.f32 %v1556, 1.442695
    %v1558 = vpow.pop %v1557
    %v1559 = vadd.f32 %v1558, 1.0
    %v1560 = vrcp.pop %v1559
    %v1561 = vmul.f32 1.0, %v1560
    %v1562 = vadd.f32 %v1545, %v384
    %v1563 = vmul.f32 %v1562, %v1554
    %v1564 = vadd.f32 %v371, %v1563
    %v1565 = vtanh.pop %v1564
    %v1566 = vsub.f32 %v1406, %v1565
    %v1567 = vmul.f32 %v1561, %v1566
    %v1568 = vadd.f32 %v1565, %v1567
    %1569 = vmatprep.subr.mxu0 %v388
    %1570 = vmatpush1.msra.mxu0 %v387
    %1571 = vmatprep.subr.mxu0 %v391
    %1572 = vmatpush1.msra.mxu0 %v390
    %1573 = vmatprep.subr.mxu0 %v394
    %1574 = vmatpush1.msra.mxu0 %v393
    %1575 = vmatprep.subr.mxu0 %v397
    %1576 = vmatpush1.msra.mxu0 %v396
    %1577 = vmatprep.subr.mxu0 %v400
    %1578 = vmatpush1.msra.mxu0 %v399
    %1579 = vmatprep.subr.mxu0 %v403
    %1580 = vmatpush1.msra.mxu0 %v402
    %1581 = vmatprep.subr.mxu0 %v406
    %1582 = vmatpush1.msra.mxu0 %v405
    %1583 = vmatprep.subr.mxu0 %v409
    %1584 = vmatpush1.msra.mxu0 %v408
    %1585 = vmatprep.subr.mxu0 %v412
    %1586 = vmatpush1.msra.mxu0 %v411
    %1587 = vmatprep.subr.mxu0 %v415
    %1588 = vmatpush1.msra.mxu0 %v414
    %1589 = vmatprep.subr.mxu0 %v418
    %1590 = vmatpush1.msra.mxu0 %v417
    %1591 = vmatprep.subr.mxu0 %v421
    %1592 = vmatpush1.msra.mxu0 %v420
    %1593 = vmatprep.subr.mxu0 %v424
    %1594 = vmatpush1.msra.mxu0 %v423
    %1595 = vmatprep.subr.mxu0 %v427
    %1596 = vmatpush1.msra.mxu0 %v426
    %1597 = vmatprep.subr.mxu0 %v430
    %1598 = vmatpush1.msra.mxu0 %v429
    %1599 = vmatprep.subr.mxu0 %v433
    %1600 = vmatpush1.msra.mxu0 %v432
    %1601 = vmatprep.subr.mxu0 0.0
    %1602 = vmatpush1.msra.mxu0 0.0
    %1603 = vmatprep.subr.mxu0 0.0
    %1604 = vmatpush1.msra.mxu0 0.0
    %1605 = vmatprep.subr.mxu0 0.0
    %1606 = vmatpush1.msra.mxu0 0.0
    %1607 = vmatprep.subr.mxu0 0.0
    %1608 = vmatpush1.msra.mxu0 0.0
    %1609 = vmatprep.subr.mxu0 0.0
    %1610 = vmatpush1.msra.mxu0 0.0
    %1611 = vmatprep.subr.mxu0 0.0
    %1612 = vmatpush1.msra.mxu0 0.0
    %1613 = vmatprep.subr.mxu0 0.0
    %1614 = vmatpush1.msra.mxu0 0.0
    %1615 = vmatprep.subr.mxu0 0.0
    %1616 = vmatpush1.msra.mxu0 0.0
    %1617 = vmatprep.subr.mxu0 0.0
    %1618 = vmatpush1.msra.mxu0 0.0
    %1619 = vmatprep.subr.mxu0 0.0
    %1620 = vmatpush1.msra.mxu0 0.0
    %1621 = vmatprep.subr.mxu0 0.0
    %1622 = vmatpush1.msra.mxu0 0.0
    %1623 = vmatprep.subr.mxu0 0.0
    %1624 = vmatpush1.msra.mxu0 0.0
    %1625 = vmatprep.subr.mxu0 0.0
    %1626 = vmatpush1.msra.mxu0 0.0
    %1627 = vmatprep.subr.mxu0 0.0
    %1628 = vmatpush1.msra.mxu0 0.0
    %1629 = vmatprep.subr.mxu0 0.0
    %1630 = vmatpush1.msra.mxu0 0.0
    %1631 = vmatprep.subr.mxu0 0.0
    %1632 = vmatpush1.msra.mxu0 0.0
    %1633 = vmatprep.mubr.f32.mxu0 0.0
    %1634 = vmatmul.mubr.f32.gmra.mrb[0].mxu0 %v1568
    %v1635 = vpop.f32.mrb[0].mxu0
    %v1636 = vadd.f32 0.0, %v1635
    %v1637 = vpop.f32.mrb[0].mxu0
    %v1638 = vadd.f32 0.0, %v1637
    %1639 = vdwg.mxu0
    %1640 = vmatprep.subr.mxu0 0.0
    %1641 = vmatpush1.msra.mxu0 %v389
    %1642 = vmatprep.subr.mxu0 0.0
    %1643 = vmatpush1.msra.mxu0 %v392
    %1644 = vmatprep.subr.mxu0 0.0
    %1645 = vmatpush1.msra.mxu0 %v395
    %1646 = vmatprep.subr.mxu0 0.0
    %1647 = vmatpush1.msra.mxu0 %v398
    %1648 = vmatprep.subr.mxu0 0.0
    %1649 = vmatpush1.msra.mxu0 %v401
    %1650 = vmatprep.subr.mxu0 0.0
    %1651 = vmatpush1.msra.mxu0 %v404
    %1652 = vmatprep.subr.mxu0 0.0
    %1653 = vmatpush1.msra.mxu0 %v407
    %1654 = vmatprep.subr.mxu0 0.0
    %1655 = vmatpush1.msra.mxu0 %v410
    %1656 = vmatprep.subr.mxu0 0.0
    %1657 = vmatpush1.msra.mxu0 %v413
    %1658 = vmatprep.subr.mxu0 0.0
    %1659 = vmatpush1.msra.mxu0 %v416
    %1660 = vmatprep.subr.mxu0 0.0
    %1661 = vmatpush1.msra.mxu0 %v419
    %1662 = vmatprep.subr.mxu0 0.0
    %1663 = vmatpush1.msra.mxu0 %v422
    %1664 = vmatprep.subr.mxu0 0.0
    %1665 = vmatpush1.msra.mxu0 %v425
    %1666 = vmatprep.subr.mxu0 0.0
    %1667 = vmatpush1.msra.mxu0 %v428
    %1668 = vmatprep.subr.mxu0 0.0
    %1669 = vmatpush1.msra.mxu0 %v431
    %1670 = vmatprep.subr.mxu0 0.0
    %1671 = vmatpush1.msra.mxu0 %v434
    %1672 = vmatprep.subr.mxu0 0.0
    %1673 = vmatpush1.msra.mxu0 0.0
    %1674 = vmatprep.subr.mxu0 0.0
    %1675 = vmatpush1.msra.mxu0 0.0
    %1676 = vmatprep.subr.mxu0 0.0
    %1677 = vmatpush1.msra.mxu0 0.0
    %1678 = vmatprep.subr.mxu0 0.0
    %1679 = vmatpush1.msra.mxu0 0.0
    %1680 = vmatprep.subr.mxu0 0.0
    %1681 = vmatpush1.msra.mxu0 0.0
    %1682 = vmatprep.subr.mxu0 0.0
    %1683 = vmatpush1.msra.mxu0 0.0
    %1684 = vmatprep.subr.mxu0 0.0
    %1685 = vmatpush1.msra.mxu0 0.0
    %1686 = vmatprep.subr.mxu0 0.0
    %1687 = vmatpush1.msra.mxu0 0.0
    %1688 = vmatprep.subr.mxu0 0.0
    %1689 = vmatpush1.msra.mxu0 0.0
    %1690 = vmatprep.subr.mxu0 0.0
    %1691 = vmatpush1.msra.mxu0 0.0
    %1692 = vmatprep.subr.mxu0 0.0
    %1693 = vmatpush1.msra.mxu0 0.0
    %1694 = vmatprep.subr.mxu0 0.0
    %1695 = vmatpush1.msra.mxu0 0.0
    %1696 = vmatprep.subr.mxu0 0.0
    %1697 = vmatpush1.msra.mxu0 0.0
    %1698 = vmatprep.subr.mxu0 0.0
    %1699 = vmatpush1.msra.mxu0 0.0
    %1700 = vmatprep.subr.mxu0 0.0
    %1701 = vmatpush1.msra.mxu0 0.0
    %1702 = vmatprep.subr.mxu0 0.0
    %1703 = vmatpush1.msra.mxu0 0.0
    %1704 = vmatprep.mubr.f32.mxu0 0.0
    %1705 = vmatmul.mubr.f32.gmra.mrb[0].mxu0 %v1568
    %v1706 = vpop.f32.mrb[0].mxu0
    %v1707 = vadd.f32 0.0, %v1706
    %v1708 = vpop.f32.mrb[0].mxu0
    %1709 = vdwg.mxu0
    %v1710 = vadd.f32 %v270, %v1636
    %v1711 = vxor.u32 %v1710, 2147483648
    %v1712 = vmul.f32 %v1711, 1.442695
    %v1713 = vpow.pop %v1712
    %v1714 = vadd.f32 %v1713, 1.0
    %v1715 = vrcp.pop %v1714
    %v1716 = vmul.f32 1.0, %v1715
    %v1717 = vadd.f32 %v272, %v1638
    %v1718 = vxor.u32 %v1717, 2147483648
    %v1719 = vmul.f32 %v1718, 1.442695
    %v1720 = vpow.pop %v1719
    %v1721 = vadd.f32 %v1720, 1.0
    %v1722 = vrcp.pop %v1721
    %v1723 = vmul.f32 1.0, %v1722
    %v1724 = vadd.f32 %v1707, %v384
    %v1725 = vmul.f32 %v1724, %v1716
    %v1726 = vadd.f32 %v376, %v1725
    %v1727 = vtanh.pop %v1726
    %v1728 = vsub.f32 %v1568, %v1727
    %v1729 = vmul.f32 %v1723, %v1728
    %v1730 = vadd.f32 %v1727, %v1729
    %v1731 = vld [vmem:[%s5] sm:$0xff]
    %v1732 = vld [vmem:[%s5 + $0x8] sm:$0xff]
    %v1733 = vld [vmem:[%s5 + $0x10] sm:$0xff]
    %v1734 = vld [vmem:[%s5 + $0x18] sm:$0xff]
    %v1735 = vld [vmem:[%s5 + $0x20] sm:$0xff]
    %v1736 = vld [vmem:[%s5 + $0x28] sm:$0xff]
    %v1737 = vld [vmem:[%s5 + $0x30] sm:$0xff]
    %v1738 = vld [vmem:[%s5 + $0x38] sm:$0xff]
    %v1739 = vld [vmem:[%s5 + $0x40] sm:$0xff]
    %v1740 = vld [vmem:[%s5 + $0x48] sm:$0xff]
    %v1741 = vld [vmem:[%s5 + $0x50] sm:$0xff]
    %v1742 = vld [vmem:[%s5 + $0x58] sm:$0xff]
    %v1743 = vld [vmem:[%s5 + $0x60] sm:$0xff]
    %v1744 = vld [vmem:[%s5 + $0x68] sm:$0xff]
    %v1745 = vld [vmem:[%s5 + $0x70] sm:$0xff]
    %v1746 = vld [vmem:[%s5 + $0x78] sm:$0xff]
    %v1747 = vld [vmem:[%s6] sm:$0x1]
    %v1749 = vlaneseq
    %v1750 = vshrl.u32 %v1749, 7
    %v1751 = vsub.s32 0, %v1750
    %v1752 = vrot.slane %v1747, %v1751
    %1754 = vmatprep.subr.mxu0 0.0
    %1755 = vmatpush1.msra.mxu0 %v1731
    %1756 = vmatprep.subr.mxu0 0.0
    %1757 = vmatpush1.msra.mxu0 %v1732
    %1758 = vmatprep.subr.mxu0 0.0
    %1759 = vmatpush1.msra.mxu0 %v1733
    %1760 = vmatprep.subr.mxu0 0.0
    %1761 = vmatpush1.msra.mxu0 %v1734
    %1762 = vmatprep.subr.mxu0 0.0
    %1763 = vmatpush1.msra.mxu0 %v1735
    %1764 = vmatprep.subr.mxu0 0.0
    %1765 = vmatpush1.msra.mxu0 %v1736
    %1766 = vmatprep.subr.mxu0 0.0
    %1767 = vmatpush1.msra.mxu0 %v1737
    %1768 = vmatprep.subr.mxu0 0.0
    %1769 = vmatpush1.msra.mxu0 %v1738
    %1770 = vmatprep.subr.mxu0 0.0
    %1771 = vmatpush1.msra.mxu0 %v1739
    %1772 = vmatprep.subr.mxu0 0.0
    %1773 = vmatpush1.msra.mxu0 %v1740
    %1774 = vmatprep.subr.mxu0 0.0
    %1775 = vmatpush1.msra.mxu0 %v1741
    %1776 = vmatprep.subr.mxu0 0.0
    %1777 = vmatpush1.msra.mxu0 %v1742
    %1778 = vmatprep.subr.mxu0 0.0
    %1779 = vmatpush1.msra.mxu0 %v1743
    %1780 = vmatprep.subr.mxu0 0.0
    %1781 = vmatpush1.msra.mxu0 %v1744
    %1782 = vmatprep.subr.mxu0 0.0
    %1783 = vmatpush1.msra.mxu0 %v1745
    %1784 = vmatprep.subr.mxu0 0.0
    %1785 = vmatpush1.msra.mxu0 %v1746
    %1786 = vmatprep.subr.mxu0 0.0
    %1787 = vmatpush1.msra.mxu0 0.0
    %1788 = vmatprep.subr.mxu0 0.0
    %1789 = vmatpush1.msra.mxu0 0.0
    %1790 = vmatprep.subr.mxu0 0.0
    %1791 = vmatpush1.msra.mxu0 0.0
    %1792 = vmatprep.subr.mxu0 0.0
    %1793 = vmatpush1.msra.mxu0 0.0
    %1794 = vmatprep.subr.mxu0 0.0
    %1795 = vmatpush1.msra.mxu0 0.0
    %1796 = vmatprep.subr.mxu0 0.0
    %1797 = vmatpush1.msra.mxu0 0.0
    %1798 = vmatprep.subr.mxu0 0.0
    %1799 = vmatpush1.msra.mxu0 0.0
    %1800 = vmatprep.subr.mxu0 0.0
    %1801 = vmatpush1.msra.mxu0 0.0
    %1802 = vmatprep.subr.mxu0 0.0
    %1803 = vmatpush1.msra.mxu0 0.0
    %1804 = vmatprep.subr.mxu0 0.0
    %1805 = vmatpush1.msra.mxu0 0.0
    %1806 = vmatprep.subr.mxu0 0.0
    %1807 = vmatpush1.msra.mxu0 0.0
    %1808 = vmatprep.subr.mxu0 0.0
    %1809 = vmatpush1.msra.mxu0 0.0
    %1810 = vmatprep.subr.mxu0 0.0
    %1811 = vmatpush1.msra.mxu0 0.0
    %1812 = vmatprep.subr.mxu0 0.0
    %1813 = vmatpush1.msra.mxu0 0.0
    %1814 = vmatprep.subr.mxu0 0.0
    %1815 = vmatpush1.msra.mxu0 0.0
    %1816 = vmatprep.subr.mxu0 0.0
    %1817 = vmatpush1.msra.mxu0 0.0
    %1818 = vmatprep.mubr.f32.mxu0 0.0
    %1819 = vmatmul.mubr.f32.gmra.mrb[0].mxu0 %v1730
    %v1820 = vpop.f32.mrb[0].mxu0
    %v1821 = vadd.f32 %v1752, %v1820
    %v1822 = vpop.f32.mrb[0].mxu0
    %1823 = vdwg.mxu0
    %vm1824 = vcmask 15360
    %v1825 = vsel %vm1824, %v1821, -inf
    %1826 = vmax.xlane.f32.xlu0 %v1825
    %v1827 = vpop.xlane.xlu0 %1826
    %v1828 = vsub.f32 %v1821, %v1827
    %v1829 = vmul.f32 %v1828, 1.442695
    %v1830 = vpow.pop %v1829
    %v1831 = vsel %vm1824, %v1830, 0.0
    %1832 = vadd.xlane.f32.xlu0 %v1831
    %v1833 = vpop.xlane.xlu0 %1832
    %v1834 = vrcp.pop %v1833
    %v1835 = vmul.f32 %v1830, %v1834
    %vm1836 = vcmask 9216
    %1837 = vst.msk [vmem:[#allocation7] sm:$0x3] %vm1836, %v1835
    // Predicated region
    $region38: #{rnn_model_forward.1} parent=1 // pred_check
      _
    $region39: #{rnn_model_forward.1} parent=1 // pred_check_branch
      %1839 = sbr.rel (0) target = $region41
    $region40: #{rnn_model_forward.1} parent=1 // pred_region
      %s1841 = ssub.s32 32, 32
      %1842 = vsyncadd [#allocation4], %s1841
      %s1844 = sshll.u32 [#allocation7], 4
      %s1845 = int_to_ptr.vmem [resolvable:$true] %s1844
      %1847 = dma.vmem_to_hbm [thread:$0]  %s1845, 32, %s7, [#allocation4]
    $region41: #{rnn_model_forward.1} parent=1 // pred_fallthru
      _
    // Predicated region
    $region42: #{rnn_model_forward.1} parent=1 // pred_check
      _
    $region43: #{rnn_model_forward.1} parent=1 // pred_check_branch
      %1849 = sbr.rel (0) target = $region45
    $region44: #{rnn_model_forward.1} parent=1 // pred_region
      %1850 = dma.done [#allocation4], 32
    $region45: #{rnn_model_forward.1} parent=1 // pred_fallthru
      _
    %1851 = vsyncpa [#allocation3], 1
    %1852 = vsyncpa [#allocation6], 1
    %1853 = vsyncpa [#allocation4], 1

</llo_original>
